<compile_context>
chip_gen: v6e
topology: v6e:2x2x1
jax: 0.10.0
libtpu: 0.0.40
codegen_flags: <defaults>
</compile_context>

<pallas_src>
import functools

import jax
import jax.numpy as jnp
from jax.experimental import pallas as pl
from jax.experimental.pallas import tpu as pltpu

_NEG_INF = -1e30  # bias for padded class columns (ignored by log-softmax)


def _round_up(x, m):
    return (x + m - 1) // m * m


def fasttext_kernel(ids_ref, tbl_ref, w_ref, b_ref, out_ref, acc_ref, *,
                    pad_token, matmul_dtype):
    # ids_ref: (TB, S)  int32         token ids for this batch tile (same for all k)
    # tbl_ref: (TV, E)  matmul_dtype  vocab-chunk k of the embedding table
    # w_ref:   (E, Cp)  matmul_dtype  fc1.weight.T, zero-padded to Cp lanes
    # b_ref:   (1, Cp)  float32       fc1.bias, padded columns = -1e30
    # out_ref: (TB, Cp) float32       log-probs (written on the last vocab step)
    # acc_ref: (TB, E)  float32       pooled-sum accumulator (VMEM scratch)
    k = pl.program_id(1)
    nk = pl.num_programs(1)

    @pl.when(k == 0)
    def _():
        acc_ref[...] = jnp.zeros_like(acc_ref)

    ids = ids_ref[...]                                    # (TB, S)
    tb, s_len = ids.shape
    tv = tbl_ref.shape[0]

    # Bag-of-words counts restricted to this vocab chunk:
    #   counts[b, v] = #{s : ids[b, s] == k*TV + v}
    # Shift ids by the chunk offset once so the hoisted iota stays chunk-local.
    # Counts <= S so they are exact in bf16; the whole working set per chunk is
    # a handful of vregs -> no spilling.
    ids_rel = ids - k * tv                                # (TB, S)
    chunk_iota = jax.lax.broadcasted_iota(jnp.int32, (tb, tv), 1)
    counts = jnp.zeros((tb, tv), matmul_dtype)
    for s in range(s_len):
        counts = counts + (ids_rel[:, s:s + 1] == chunk_iota).astype(matmul_dtype)

    # Gather + sum-pool fused into an MXU matmul, accumulated over vocab chunks.
    acc_ref[...] += jnp.dot(counts, tbl_ref[...],
                            preferred_element_type=jnp.float32)   # (TB, E) f32

    @pl.when(k == nk - 1)
    def _():
        # word_count from token ids. Identical to the original
        # (embedded.pow(2).sum(-1) > 0).sum(-1) because the pad row of the
        # table is exactly zero (enforced in the wrapper).
        # TODO(synk): a non-pad token whose embedding row happens to be
        # all-zero would be counted here but excluded by the squared-norm test.
        word_count = jnp.sum((ids != pad_token).astype(jnp.float32),
                             axis=-1, keepdims=True)      # (TB, 1)
        # Exact mean (tiny tile, cost hidden under the counts phase).
        # All-pad rows give 0/0 -> nan, matching the PyTorch module (no clamp).
        pooled = acc_ref[...] / word_count                # (TB, E) f32

        # TODO(synk): nn.Dropout is identity at inference; training-mode
        # dropout (random masking + 1/(1-p) scaling) is not implemented here.
        logits = jnp.dot(pooled.astype(matmul_dtype), w_ref[...],
                         preferred_element_type=jnp.float32) + b_ref[...]

        # Numerically stable LogSoftmax over the lane-dense (padded) class
        # axis; padded columns carry -1e30 bias -> exp underflows to 0.
        m = jnp.max(logits, axis=-1, keepdims=True)
        shifted = logits - m
        lse = jnp.log(jnp.sum(jnp.exp(shifted), axis=-1, keepdims=True))
        out_ref[...] = shifted - lse


def fasttext_forward(sentences, embedding_table, fc1_w, fc1_b, *,
                     pad_token=0, batch_tile=128, vocab_tile=128,
                     matmul_dtype=jnp.bfloat16):
    """sentences: (B, S) int; embedding_table: (V, E); fc1_w: (C, E); fc1_b: (C,)."""
    B, S = sentences.shape
    V, E = embedding_table.shape
    C = fc1_w.shape[0]

    TB = min(batch_tile, _round_up(B, 8))
    Bp = _round_up(B, TB)
    TV = vocab_tile                          # lane-dense counts / MXU K chunk
    Vp = _round_up(V, TV)
    Cp = _round_up(C, 128)                   # lane-dense logits -> unmasked vst

    ids = jnp.pad(sentences.astype(jnp.int32), ((0, Bp - B), (0, 0)),
                  constant_values=pad_token)
    # The counts @ table reformulation and the (ids != pad) word count both
    # require the pad row of the table to be exactly zero
    # (nn.Embedding(padding_idx=...) keeps it zero); enforce it explicitly.
    tbl = embedding_table.astype(jnp.float32).at[pad_token].set(0.0)
    tbl = jnp.pad(tbl, ((0, Vp - V), (0, 0))).astype(matmul_dtype)
    w_t = jnp.pad(fc1_w.astype(jnp.float32).T,
                  ((0, 0), (0, Cp - C))).astype(matmul_dtype)
    bias = jnp.pad(fc1_b.astype(jnp.float32), (0, Cp - C),
                   constant_values=_NEG_INF).reshape(1, Cp)

    grid = (Bp // TB, Vp // TV)
    mm_bytes = jnp.dtype(matmul_dtype).itemsize
    cost = pl.CostEstimate(
        flops=int(2 * Bp * (Vp * E + E * Cp)),
        transcendentals=int(Bp * (Cp + 1)),
        bytes_accessed=int(
            Bp * S * 4                          # ids
            + Bp * Cp * 4                       # output
            + grid[0] * Vp * E * mm_bytes       # table re-streamed per batch tile
            + E * Cp * mm_bytes + Cp * 4),      # weights/bias fetched once
    )

    kernel = functools.partial(fasttext_kernel, pad_token=pad_token,
                               matmul_dtype=matmul_dtype)

    out = pl.pallas_call(
        kernel,
        out_shape=jax.ShapeDtypeStruct((Bp, Cp), jnp.float32),
        grid=grid,
        in_specs=[
            pl.BlockSpec((TB, S), lambda i, k: (i, 0)),   # token ids (batch tile)
            pl.BlockSpec((TV, E), lambda i, k: (k, 0)),   # table vocab chunk
            pl.BlockSpec((E, Cp), lambda i, k: (0, 0)),   # fc1.weight.T (padded)
            pl.BlockSpec((1, Cp), lambda i, k: (0, 0)),   # fc1.bias (padded)
        ],
        out_specs=pl.BlockSpec((TB, Cp), lambda i, k: (i, 0)),
        scratch_shapes=[pltpu.VMEM((TB, E), jnp.float32)],
        compiler_params=pltpu.CompilerParams(
            dimension_semantics=("parallel", "arbitrary"),
            vmem_limit_bytes=32 * 1024 * 1024),
        cost_estimate=cost,
    )(ids, tbl, w_t, bias)

    return out[:B, :C]


if __name__ == "__main__":
    # Module hyperparameters (synthetic, deterministic init).
    word_size = 500        # vocab size  -> 4 vocab chunks of 128
    embedding_size = 64
    class_num = 6
    pad_token = 0
    batch = 256            # 2 batch tiles of 128 rows
    seq = 16

    key = jax.random.PRNGKey(0)
    k_emb, k_w, k_b, k_tok = jax.random.split(key, 4)

    # nn.Embedding(word_size, embedding_size, padding_idx=pad_token):
    # row `pad_token` is zero.
    embedding_table = jax.random.normal(
        k_emb, (word_size, embedding_size), dtype=jnp.float32) * 0.1
    embedding_table = embedding_table.at[pad_token].set(0.0)

    # nn.Linear(embedding_size, class_num)
    fc1_w = jax.random.normal(
        k_w, (class_num, embedding_size), dtype=jnp.float32) * 0.1
    fc1_b = jax.random.normal(k_b, (class_num,), dtype=jnp.float32) * 0.1

    # Token ids; trailing pad tokens per sentence so word_count < seq.
    sentences = jax.random.randint(
        k_tok, (batch, seq), minval=1, maxval=word_size, dtype=jnp.int32)
    sentences = sentences.at[:, seq - 3:].set(pad_token)

    out = fasttext_forward(sentences, embedding_table, fc1_w, fc1_b,
                           pad_token=pad_token)
    out = jax.block_until_ready(out)

    # Pure-JAX f32 reference of the original PyTorch forward pass.
    emb_ref = jnp.take(embedding_table, sentences, axis=0)
    wc = jnp.sum((jnp.sum(emb_ref ** 2, axis=-1) > 0).astype(jnp.float32),
                 axis=-1, keepdims=True)
    pooled_ref = jnp.sum(emb_ref, axis=1) / wc
    logits_ref = pooled_ref @ fc1_w.T + fc1_b
    ref = jax.nn.log_softmax(logits_ref, axis=-1)

    max_err = float(jnp.max(jnp.abs(out - ref)))
    # Tolerance covers bf16 rounding of the embedding table / fc1 weights
    # (counts and word_count are exact, accumulation is f32).
    assert out.shape == ref.shape
    assert jnp.allclose(out, ref, atol=1e-2, rtol=1e-2), f"mismatch: {max_err}"

    print("KERNEL_OK")
</pallas_src>

<mosaic_0001>
module attributes {stable_mosaic.version = 11 : i64} {
  func.func @fasttext_kernel(%arg0: i32, %arg1: i32, %arg2: memref<128x16xi32, #tpu.memory_space<vmem>>, %arg3: memref<128x64xbf16, #tpu.memory_space<vmem>>, %arg4: memref<64x128xbf16, #tpu.memory_space<vmem>>, %arg5: memref<1x128xf32, #tpu.memory_space<vmem>>, %arg6: memref<128x128xf32, #tpu.memory_space<vmem>>, %arg7: memref<128x64xf32, #tpu.memory_space<vmem>>) attributes {dimension_semantics = [#tpu.dimension_semantics<parallel>, #tpu.dimension_semantics<arbitrary>], iteration_bounds = array<i64: 2, 4>, scalar_prefetch = 0 : i64, scratch_operands = 1 : i64, tpu.core_type = #tpu.core_type<tc>, window_params = [{transform_indices = @transform_0, window_bounds = array<i64: 128, 16>}, {transform_indices = @transform_1, window_bounds = array<i64: 128, 64>}, {pipeline_mode = #tpu.pipeline_mode<synchronous>, transform_indices = @transform_2, window_bounds = array<i64: 64, 128>}, {pipeline_mode = #tpu.pipeline_mode<synchronous>, transform_indices = @transform_3, window_bounds = array<i64: 1, 128>}, {transform_indices = @transform_4, window_bounds = array<i64: 128, 128>}]} {
    %c0_i32 = arith.constant 0 : i32
    %0 = arith.cmpi eq, %arg1, %c0_i32 : i32
    %1 = arith.extui %0 : i1 to i32
    %c0_i32_0 = arith.constant 0 : i32
    %2 = arith.cmpi ne, %1, %c0_i32_0 : i32
    scf.if %2 {
      %cst_10 = arith.constant 0.000000e+00 : f32
      %129 = vector.broadcast %cst_10 : f32 to vector<128x64xf32>
      %c0_11 = arith.constant 0 : index
      %c0_12 = arith.constant 0 : index
      %130 = vector.load %arg7[%c0_11, %c0_12] : memref<128x64xf32, #tpu.memory_space<vmem>>, vector<128x64xf32>
      tpu.vector_store %arg7[%c0_11, %c0_12], %129 {strides = array<i32>} : memref<128x64xf32, #tpu.memory_space<vmem>>, vector<128x64xf32>,
    } else {
    }
    %c0 = arith.constant 0 : index
    %c0_1 = arith.constant 0 : index
    %3 = vector.load %arg2[%c0, %c0_1] : memref<128x16xi32, #tpu.memory_space<vmem>>, vector<128x16xi32>
    %c128_i32 = arith.constant 128 : i32
    %4 = arith.muli %arg1, %c128_i32 : i32
    %5 = vector.broadcast %4 : i32 to vector<128x16xi32>
    %6 = arith.subi %3, %5 : vector<128x16xi32>
    %7 = tpu.iota {dimensions = array<i32: 1>} : vector<128x128xi32>
    %cst = arith.constant 0.000000e+00 : bf16
    %8 = vector.broadcast %cst : bf16 to vector<128x128xbf16>
    %9 = vector.extract_strided_slice %6 {offsets = [0, 0], sizes = [128, 1], strides = [1, 1]} : vector<128x16xi32> to vector<128x1xi32>
    %10 = vector.broadcast %9 : vector<128x1xi32> to vector<128x128xi32>
    %11 = arith.cmpi eq, %10, %7 : vector<128x128xi32>
    %12 = arith.extui %11 : vector<128x128xi1> to vector<128x128xi32>
    %13 = arith.sitofp %12 : vector<128x128xi32> to vector<128x128xf32>
    %14 = arith.truncf %13 : vector<128x128xf32> to vector<128x128xbf16>
    %15 = arith.addf %8, %14 : vector<128x128xbf16>
    %16 = vector.extract_strided_slice %6 {offsets = [0, 1], sizes = [128, 1], strides = [1, 1]} : vector<128x16xi32> to vector<128x1xi32>
    %17 = vector.broadcast %16 : vector<128x1xi32> to vector<128x128xi32>
    %18 = arith.cmpi eq, %17, %7 : vector<128x128xi32>
    %19 = arith.extui %18 : vector<128x128xi1> to vector<128x128xi32>
    %20 = arith.sitofp %19 : vector<128x128xi32> to vector<128x128xf32>
    %21 = arith.truncf %20 : vector<128x128xf32> to vector<128x128xbf16>
    %22 = arith.addf %15, %21 : vector<128x128xbf16>
    %23 = vector.extract_strided_slice %6 {offsets = [0, 2], sizes = [128, 1], strides = [1, 1]} : vector<128x16xi32> to vector<128x1xi32>
    %24 = vector.broadcast %23 : vector<128x1xi32> to vector<128x128xi32>
    %25 = arith.cmpi eq, %24, %7 : vector<128x128xi32>
    %26 = arith.extui %25 : vector<128x128xi1> to vector<128x128xi32>
    %27 = arith.sitofp %26 : vector<128x128xi32> to vector<128x128xf32>
    %28 = arith.truncf %27 : vector<128x128xf32> to vector<128x128xbf16>
    %29 = arith.addf %22, %28 : vector<128x128xbf16>
    %30 = vector.extract_strided_slice %6 {offsets = [0, 3], sizes = [128, 1], strides = [1, 1]} : vector<128x16xi32> to vector<128x1xi32>
    %31 = vector.broadcast %30 : vector<128x1xi32> to vector<128x128xi32>
    %32 = arith.cmpi eq, %31, %7 : vector<128x128xi32>
    %33 = arith.extui %32 : vector<128x128xi1> to vector<128x128xi32>
    %34 = arith.sitofp %33 : vector<128x128xi32> to vector<128x128xf32>
    %35 = arith.truncf %34 : vector<128x128xf32> to vector<128x128xbf16>
    %36 = arith.addf %29, %35 : vector<128x128xbf16>
    %37 = vector.extract_strided_slice %6 {offsets = [0, 4], sizes = [128, 1], strides = [1, 1]} : vector<128x16xi32> to vector<128x1xi32>
    %38 = vector.broadcast %37 : vector<128x1xi32> to vector<128x128xi32>
    %39 = arith.cmpi eq, %38, %7 : vector<128x128xi32>
    %40 = arith.extui %39 : vector<128x128xi1> to vector<128x128xi32>
    %41 = arith.sitofp %40 : vector<128x128xi32> to vector<128x128xf32>
    %42 = arith.truncf %41 : vector<128x128xf32> to vector<128x128xbf16>
    %43 = arith.addf %36, %42 : vector<128x128xbf16>
    %44 = vector.extract_strided_slice %6 {offsets = [0, 5], sizes = [128, 1], strides = [1, 1]} : vector<128x16xi32> to vector<128x1xi32>
    %45 = vector.broadcast %44 : vector<128x1xi32> to vector<128x128xi32>
    %46 = arith.cmpi eq, %45, %7 : vector<128x128xi32>
    %47 = arith.extui %46 : vector<128x128xi1> to vector<128x128xi32>
    %48 = arith.sitofp %47 : vector<128x128xi32> to vector<128x128xf32>
    %49 = arith.truncf %48 : vector<128x128xf32> to vector<128x128xbf16>
    %50 = arith.addf %43, %49 : vector<128x128xbf16>
    %51 = vector.extract_strided_slice %6 {offsets = [0, 6], sizes = [128, 1], strides = [1, 1]} : vector<128x16xi32> to vector<128x1xi32>
    %52 = vector.broadcast %51 : vector<128x1xi32> to vector<128x128xi32>
    %53 = arith.cmpi eq, %52, %7 : vector<128x128xi32>
    %54 = arith.extui %53 : vector<128x128xi1> to vector<128x128xi32>
    %55 = arith.sitofp %54 : vector<128x128xi32> to vector<128x128xf32>
    %56 = arith.truncf %55 : vector<128x128xf32> to vector<128x128xbf16>
    %57 = arith.addf %50, %56 : vector<128x128xbf16>
    %58 = vector.extract_strided_slice %6 {offsets = [0, 7], sizes = [128, 1], strides = [1, 1]} : vector<128x16xi32> to vector<128x1xi32>
    %59 = vector.broadcast %58 : vector<128x1xi32> to vector<128x128xi32>
    %60 = arith.cmpi eq, %59, %7 : vector<128x128xi32>
    %61 = arith.extui %60 : vector<128x128xi1> to vector<128x128xi32>
    %62 = arith.sitofp %61 : vector<128x128xi32> to vector<128x128xf32>
    %63 = arith.truncf %62 : vector<128x128xf32> to vector<128x128xbf16>
    %64 = arith.addf %57, %63 : vector<128x128xbf16>
    %65 = vector.extract_strided_slice %6 {offsets = [0, 8], sizes = [128, 1], strides = [1, 1]} : vector<128x16xi32> to vector<128x1xi32>
    %66 = vector.broadcast %65 : vector<128x1xi32> to vector<128x128xi32>
    %67 = arith.cmpi eq, %66, %7 : vector<128x128xi32>
    %68 = arith.extui %67 : vector<128x128xi1> to vector<128x128xi32>
    %69 = arith.sitofp %68 : vector<128x128xi32> to vector<128x128xf32>
    %70 = arith.truncf %69 : vector<128x128xf32> to vector<128x128xbf16>
    %71 = arith.addf %64, %70 : vector<128x128xbf16>
    %72 = vector.extract_strided_slice %6 {offsets = [0, 9], sizes = [128, 1], strides = [1, 1]} : vector<128x16xi32> to vector<128x1xi32>
    %73 = vector.broadcast %72 : vector<128x1xi32> to vector<128x128xi32>
    %74 = arith.cmpi eq, %73, %7 : vector<128x128xi32>
    %75 = arith.extui %74 : vector<128x128xi1> to vector<128x128xi32>
    %76 = arith.sitofp %75 : vector<128x128xi32> to vector<128x128xf32>
    %77 = arith.truncf %76 : vector<128x128xf32> to vector<128x128xbf16>
    %78 = arith.addf %71, %77 : vector<128x128xbf16>
    %79 = vector.extract_strided_slice %6 {offsets = [0, 10], sizes = [128, 1], strides = [1, 1]} : vector<128x16xi32> to vector<128x1xi32>
    %80 = vector.broadcast %79 : vector<128x1xi32> to vector<128x128xi32>
    %81 = arith.cmpi eq, %80, %7 : vector<128x128xi32>
    %82 = arith.extui %81 : vector<128x128xi1> to vector<128x128xi32>
    %83 = arith.sitofp %82 : vector<128x128xi32> to vector<128x128xf32>
    %84 = arith.truncf %83 : vector<128x128xf32> to vector<128x128xbf16>
    %85 = arith.addf %78, %84 : vector<128x128xbf16>
    %86 = vector.extract_strided_slice %6 {offsets = [0, 11], sizes = [128, 1], strides = [1, 1]} : vector<128x16xi32> to vector<128x1xi32>
    %87 = vector.broadcast %86 : vector<128x1xi32> to vector<128x128xi32>
    %88 = arith.cmpi eq, %87, %7 : vector<128x128xi32>
    %89 = arith.extui %88 : vector<128x128xi1> to vector<128x128xi32>
    %90 = arith.sitofp %89 : vector<128x128xi32> to vector<128x128xf32>
    %91 = arith.truncf %90 : vector<128x128xf32> to vector<128x128xbf16>
    %92 = arith.addf %85, %91 : vector<128x128xbf16>
    %93 = vector.extract_strided_slice %6 {offsets = [0, 12], sizes = [128, 1], strides = [1, 1]} : vector<128x16xi32> to vector<128x1xi32>
    %94 = vector.broadcast %93 : vector<128x1xi32> to vector<128x128xi32>
    %95 = arith.cmpi eq, %94, %7 : vector<128x128xi32>
    %96 = arith.extui %95 : vector<128x128xi1> to vector<128x128xi32>
    %97 = arith.sitofp %96 : vector<128x128xi32> to vector<128x128xf32>
    %98 = arith.truncf %97 : vector<128x128xf32> to vector<128x128xbf16>
    %99 = arith.addf %92, %98 : vector<128x128xbf16>
    %100 = vector.extract_strided_slice %6 {offsets = [0, 13], sizes = [128, 1], strides = [1, 1]} : vector<128x16xi32> to vector<128x1xi32>
    %101 = vector.broadcast %100 : vector<128x1xi32> to vector<128x128xi32>
    %102 = arith.cmpi eq, %101, %7 : vector<128x128xi32>
    %103 = arith.extui %102 : vector<128x128xi1> to vector<128x128xi32>
    %104 = arith.sitofp %103 : vector<128x128xi32> to vector<128x128xf32>
    %105 = arith.truncf %104 : vector<128x128xf32> to vector<128x128xbf16>
    %106 = arith.addf %99, %105 : vector<128x128xbf16>
    %107 = vector.extract_strided_slice %6 {offsets = [0, 14], sizes = [128, 1], strides = [1, 1]} : vector<128x16xi32> to vector<128x1xi32>
    %108 = vector.broadcast %107 : vector<128x1xi32> to vector<128x128xi32>
    %109 = arith.cmpi eq, %108, %7 : vector<128x128xi32>
    %110 = arith.extui %109 : vector<128x128xi1> to vector<128x128xi32>
    %111 = arith.sitofp %110 : vector<128x128xi32> to vector<128x128xf32>
    %112 = arith.truncf %111 : vector<128x128xf32> to vector<128x128xbf16>
    %113 = arith.addf %106, %112 : vector<128x128xbf16>
    %114 = vector.extract_strided_slice %6 {offsets = [0, 15], sizes = [128, 1], strides = [1, 1]} : vector<128x16xi32> to vector<128x1xi32>
    %115 = vector.broadcast %114 : vector<128x1xi32> to vector<128x128xi32>
    %116 = arith.cmpi eq, %115, %7 : vector<128x128xi32>
    %117 = arith.extui %116 : vector<128x128xi1> to vector<128x128xi32>
    %118 = arith.sitofp %117 : vector<128x128xi32> to vector<128x128xf32>
    %119 = arith.truncf %118 : vector<128x128xf32> to vector<128x128xbf16>
    %120 = arith.addf %113, %119 : vector<128x128xbf16>
    %c0_2 = arith.constant 0 : index
    %c0_3 = arith.constant 0 : index
    %121 = vector.load %arg7[%c0_2, %c0_3] : memref<128x64xf32, #tpu.memory_space<vmem>>, vector<128x64xf32>
    %c0_4 = arith.constant 0 : index
    %c0_5 = arith.constant 0 : index
    %122 = vector.load %arg3[%c0_4, %c0_5] : memref<128x64xbf16, #tpu.memory_space<vmem>>, vector<128x64xbf16>
    %cst_6 = arith.constant dense<0.000000e+00> : vector<128x64xf32>
    %123 = tpu.matmul %120, %122, %cst_6 {dimension_numbers = #tpu.dot_dimension_numbers<[1], [0], [0], [1], [0, 0, 1, 1], [], []>} : vector<128x128xbf16>, vector<128x64xbf16>, vector<128x64xf32> -> vector<128x64xf32>
    %124 = arith.addf %121, %123 : vector<128x64xf32>
    %c0_7 = arith.constant 0 : index
    %c0_8 = arith.constant 0 : index
    %125 = vector.load %arg7[%c0_7, %c0_8] : memref<128x64xf32, #tpu.memory_space<vmem>>, vector<128x64xf32>
    tpu.vector_store %arg7[%c0_7, %c0_8], %124 {strides = array<i32>} : memref<128x64xf32, #tpu.memory_space<vmem>>, vector<128x64xf32>,
    %c3_i32 = arith.constant 3 : i32
    %126 = arith.cmpi eq, %arg1, %c3_i32 : i32
    %127 = arith.extui %126 : i1 to i32
    %c0_i32_9 = arith.constant 0 : i32
    %128 = arith.cmpi ne, %127, %c0_i32_9 : i32
    scf.if %128 {
      %c0_i32_10 = arith.constant 0 : i32
      %129 = vector.broadcast %c0_i32_10 : i32 to vector<128x16xi32>
      %130 = arith.cmpi ne, %3, %129 : vector<128x16xi32>
      %131 = arith.extui %130 : vector<128x16xi1> to vector<128x16xi32>
      %132 = arith.sitofp %131 : vector<128x16xi32> to vector<128x16xf32>
      %cst_11 = arith.constant dense<0.000000e+00> : vector<128xf32>
      %133 = vector.multi_reduction <add>, %132, %cst_11 [1] : vector<128x16xf32> to vector<128xf32>
      %134 = vector.shape_cast %133 : vector<128xf32> to vector<128x1xf32>
      %c0_12 = arith.constant 0 : index
      %c0_13 = arith.constant 0 : index
      %135 = vector.load %arg7[%c0_12, %c0_13] : memref<128x64xf32, #tpu.memory_space<vmem>>, vector<128x64xf32>
      %136 = vector.broadcast %134 : vector<128x1xf32> to vector<128x64xf32>
      %137 = arith.divf %135, %136 : vector<128x64xf32>
      %138 = arith.truncf %137 : vector<128x64xf32> to vector<128x64xbf16>
      %c0_14 = arith.constant 0 : index
      %c0_15 = arith.constant 0 : index
      %139 = vector.load %arg4[%c0_14, %c0_15] : memref<64x128xbf16, #tpu.memory_space<vmem>>, vector<64x128xbf16>
      %cst_16 = arith.constant dense<0.000000e+00> : vector<128x128xf32>
      %140 = tpu.matmul %138, %139, %cst_16 {dimension_numbers = #tpu.dot_dimension_numbers<[1], [0], [0], [1], [0, 0, 1, 1], [], []>} : vector<128x64xbf16>, vector<64x128xbf16>, vector<128x128xf32> -> vector<128x128xf32>
      %c0_17 = arith.constant 0 : index
      %c0_18 = arith.constant 0 : index
      %141 = vector.load %arg5[%c0_17, %c0_18] : memref<1x128xf32, #tpu.memory_space<vmem>>, vector<1x128xf32>
      %142 = vector.broadcast %141 : vector<1x128xf32> to vector<128x128xf32>
      %143 = arith.addf %140, %142 : vector<128x128xf32>
      %cst_19 = arith.constant dense<0xFF800000> : vector<128xf32>
      %144 = vector.multi_reduction <maximumf>, %143, %cst_19 [1] : vector<128x128xf32> to vector<128xf32>
      %145 = vector.shape_cast %144 : vector<128xf32> to vector<128x1xf32>
      %146 = vector.broadcast %145 : vector<128x1xf32> to vector<128x128xf32>
      %147 = arith.subf %143, %146 : vector<128x128xf32>
      %148 = math.exp %147 : vector<128x128xf32>
      %cst_20 = arith.constant dense<0.000000e+00> : vector<128xf32>
      %149 = vector.multi_reduction <add>, %148, %cst_20 [1] : vector<128x128xf32> to vector<128xf32>
      %150 = vector.shape_cast %149 : vector<128xf32> to vector<128x1xf32>
      %151 = math.log %150 : vector<128x1xf32>
      %152 = vector.broadcast %151 : vector<128x1xf32> to vector<128x128xf32>
      %153 = arith.subf %147, %152 : vector<128x128xf32>
      %c0_21 = arith.constant 0 : index
      %c0_22 = arith.constant 0 : index
      %154 = vector.load %arg6[%c0_21, %c0_22] : memref<128x128xf32, #tpu.memory_space<vmem>>, vector<128x128xf32>
      tpu.vector_store %arg6[%c0_21, %c0_22], %153 {strides = array<i32>} : memref<128x128xf32, #tpu.memory_space<vmem>>, vector<128x128xf32>,
    } else {
    }
    return
  }
  func.func @transform_0(%arg0: i32, %arg1: i32) -> (i32, i32) {
    %c0_i32 = arith.constant 0 : i32
    %c0_i32_0 = arith.constant 0 : i32
    return %arg0, %c0_i32 : i32, i32
  }
  func.func @transform_1(%arg0: i32, %arg1: i32) -> (i32, i32) {
    %c0_i32 = arith.constant 0 : i32
    %c0_i32_0 = arith.constant 0 : i32
    return %arg1, %c0_i32 : i32, i32
  }
  func.func @transform_2(%arg0: i32, %arg1: i32) -> (i32, i32) {
    %c0_i32 = arith.constant 0 : i32
    %c0_i32_0 = arith.constant 0 : i32
    %c0_i32_1 = arith.constant 0 : i32
    return %c0_i32, %c0_i32_0 : i32, i32
  }
  func.func @transform_3(%arg0: i32, %arg1: i32) -> (i32, i32) {
    %c0_i32 = arith.constant 0 : i32
    %c0_i32_0 = arith.constant 0 : i32
    %c0_i32_1 = arith.constant 0 : i32
    return %c0_i32, %c0_i32_0 : i32, i32
  }
  func.func @transform_4(%arg0: i32, %arg1: i32) -> (i32, i32) {
    %c0_i32 = arith.constant 0 : i32
    %c0_i32_0 = arith.constant 0 : i32
    return %arg0, %c0_i32 : i32, i32
  }
}

</mosaic_0001>

<llo_original>
// kernel: tpu_custom_call.1
$region0: #{tpu_custom_call.1}
  #allocation0 [shape = 'u32[]', space=smem, size = 0x4, offset = 0x4, fixed_abs, tag = 'smem constant byte address 0x4 - core index']
  #allocation1 [shape = 'u32[144,128]{1,0:T(1,128)}', space=vmem, size = 0x12000, scoped, tag = 'internal scratch']
  #allocation2 [shape = 'f32[128,64]{1,0:T(8,128)}', space=vmem, size = 0x10000, scoped, tag = 'scratch operand']
  %s0 = inlined_call_operand.vmem [shape: s32[256,16], index: 0, kind: input, shape index: {}]
  %s1 = inlined_call_operand.vmem [shape: bf16[512,64], index: 1, kind: input, shape index: {}]
  %s2 = inlined_call_operand.vmem [shape: bf16[64,128], index: 2, kind: input, shape index: {}]
  %s3 = inlined_call_operand.vmem [shape: f32[1,128], index: 3, kind: input, shape index: {}]
  %s4 = inlined_call_operand.hbm [shape: f32[256,128], index: 4, kind: output, shape index: {}]
  %s5 = sld [smem:[#allocation0]]
  $region57: #{tpu_custom_call.1} parent=0
    _
  %s7 = ssub.s32 1, %s5
  %s8 = scalar_select 0, %s7, %s5
  $region1: #{tpu_custom_call.1} parent=0
    #allocation3 [shape = 'u8[131072]{0}', space=vmem, size = 0x20000, scoped, tag = 'output window, operand 0']
    #allocation4 [shape = 's32[2]{0}', space=sflag, size = 0x8, scoped, tag = 'scoped memory for tpu_custom_call.1']
    %9 = vsyncpa [#allocation4], 0
    %s10 = scalar_lea.sflag [#allocation4], 1
    %11 = vsyncpa %s10, 0
    loop: start=0, step=1, limit=10
    $region2: #{tpu_custom_call.1} parent=1 // loop_pre_header
      _
    $region3: #{tpu_custom_call.1} parent=1 // loop_header
      %s13 = sphi 0, %s17
      %p14 = scmp.ge.s32.totalorder %s13, 10
      %s20 = sphi 0, %s32
      %s21 = sphi 0, %s28
      %s22 = sphi 0, %s20
      %s23 = sphi 0, %s21
      %s24 = sphi 0, %s22
      %s25 = sphi 0, %s23
      %s35 = sphi 0, %s37
      %s38 = sphi 0, %s35
      %s39 = sphi 0, %s38
      %s55 = sphi 0, %s39
      %s61 = sphi 0, %s63
      %s64 = sphi 0, %s61
      %s65 = sphi 0, %s64
      %s81 = sphi 0, %s65
      %s85 = sphi 0, %s85
      %s87 = sphi 0, %s85
      %s88 = sphi 0, %s87
      %s102 = sphi 0, %s88
      %s106 = sphi 0, %s106
      %s108 = sphi 0, %s106
      %s109 = sphi 0, %s108
      %s123 = sphi 0, %s109
      %s129 = sphi 0, %s131
      %s132 = sphi 0, %s129
      %s133 = sphi 0, %s132
      %s149 = sphi 0, %s133
    $region4: #{tpu_custom_call.1} parent=1 // loop_header_branch
      %16 = sbr.rel (%p14) target = $region8
    $region5: #{tpu_custom_call.1} parent=1 // loop_body
      %s18 = ssub.s32 %s13, 1
      %s19 = ssub.s32 %s13, 2
      %s26 = sadd.s32 1, %s21
      %p27 = scmp.ge.s32.totalorder %s26, 4
      %s28 = scalar_select %p27, 0, %s26
      %s29 = sadd.s32 1, %s20
      %s30 = scalar_select %p27, %s29, %s20
      %p31 = scmp.ge.s32.totalorder %s30, 2
      %s32 = scalar_select %p31, 0, %s30
      %s33 = ssub.s32 %s20, %s32
      %p34 = scmp.eq.s32.totalorder %s33, 0
      %s36 = sadd.s32 %s35, 1
      %s37 = scalar_select %p34, %s35, %s36
      %p40 = pneg %p34
      %p41 = scmp.eq.s32.totalorder %s13, 7
      %p42 = por %p40, %p41
      %p43 = scmp.ne.s32.totalorder %s35, %s38
      %p44 = scmp.eq.s32.totalorder %s13, 0
      %p45 = por %p43, %p44
      %p46 = scmp.ne.s32.totalorder %s35, %s38
      %p47 = scmp.eq.s32.totalorder %s18, 7
      %p48 = por %p46, %p47
      %p49 = scmp.ne.s32.totalorder %s38, %s39
      %p50 = scmp.eq.s32.totalorder %s18, 0
      %p51 = por %p49, %p50
      %p52 = scmp.ne.s32.totalorder %s38, %s39
      %p53 = scmp.eq.s32.totalorder %s19, 7
      %p54 = por %p52, %p53
      %p56 = scmp.ne.s32.totalorder %s39, %s55
      %p57 = scmp.eq.s32.totalorder %s19, 0
      %p58 = por %p56, %p57
      %s59 = ssub.s32 %s21, %s28
      %p60 = scmp.eq.s32.totalorder %s59, 0
      %s62 = sadd.s32 %s61, 1
      %s63 = scalar_select %p60, %s61, %s62
      %p66 = pneg %p60
      %p67 = scmp.eq.s32.totalorder %s13, 7
      %p68 = por %p66, %p67
      %p69 = scmp.ne.s32.totalorder %s61, %s64
      %p70 = scmp.eq.s32.totalorder %s13, 0
      %p71 = por %p69, %p70
      %p72 = scmp.ne.s32.totalorder %s61, %s64
      %p73 = scmp.eq.s32.totalorder %s18, 7
      %p74 = por %p72, %p73
      %p75 = scmp.ne.s32.totalorder %s64, %s65
      %p76 = scmp.eq.s32.totalorder %s18, 0
      %p77 = por %p75, %p76
      %p78 = scmp.ne.s32.totalorder %s64, %s65
      %p79 = scmp.eq.s32.totalorder %s19, 7
      %p80 = por %p78, %p79
      %p82 = scmp.ne.s32.totalorder %s65, %s81
      %p83 = scmp.eq.s32.totalorder %s19, 0
      %p84 = por %p82, %p83
      %s86 = sadd.s32 %s85, 1
      %p89 = scmp.eq.s32.totalorder %s13, 7
      %p90 = scmp.ne.s32.totalorder %s85, %s87
      %p91 = scmp.eq.s32.totalorder %s13, 0
      %p92 = por %p90, %p91
      %p93 = scmp.ne.s32.totalorder %s85, %s87
      %p94 = scmp.eq.s32.totalorder %s18, 7
      %p95 = por %p93, %p94
      %p96 = scmp.ne.s32.totalorder %s87, %s88
      %p97 = scmp.eq.s32.totalorder %s18, 0
      %p98 = por %p96, %p97
      %p99 = scmp.ne.s32.totalorder %s87, %s88
      %p100 = scmp.eq.s32.totalorder %s19, 7
      %p101 = por %p99, %p100
      %p103 = scmp.ne.s32.totalorder %s88, %s102
      %p104 = scmp.eq.s32.totalorder %s19, 0
      %p105 = por %p103, %p104
      %s107 = sadd.s32 %s106, 1
      %p110 = scmp.eq.s32.totalorder %s13, 7
      %p111 = scmp.ne.s32.totalorder %s106, %s108
      %p112 = scmp.eq.s32.totalorder %s13, 0
      %p113 = por %p111, %p112
      %p114 = scmp.ne.s32.totalorder %s106, %s108
      %p115 = scmp.eq.s32.totalorder %s18, 7
      %p116 = por %p114, %p115
      %p117 = scmp.ne.s32.totalorder %s108, %s109
      %p118 = scmp.eq.s32.totalorder %s18, 0
      %p119 = por %p117, %p118
      %p120 = scmp.ne.s32.totalorder %s108, %s109
      %p121 = scmp.eq.s32.totalorder %s19, 7
      %p122 = por %p120, %p121
      %p124 = scmp.ne.s32.totalorder %s109, %s123
      %p125 = scmp.eq.s32.totalorder %s19, 0
      %p126 = por %p124, %p125
      %s127 = ssub.s32 %s20, %s32
      %p128 = scmp.eq.s32.totalorder %s127, 0
      %s130 = sadd.s32 %s129, 1
      %s131 = scalar_select %p128, %s129, %s130
      %p134 = pneg %p128
      %p135 = scmp.eq.s32.totalorder %s13, 7
      %p136 = por %p134, %p135
      %p137 = scmp.ne.s32.totalorder %s129, %s132
      %p138 = scmp.eq.s32.totalorder %s13, 0
      %p139 = por %p137, %p138
      %p140 = scmp.ne.s32.totalorder %s129, %s132
      %p141 = scmp.eq.s32.totalorder %s18, 7
      %p142 = por %p140, %p141
      %p143 = scmp.ne.s32.totalorder %s132, %s133
      %p144 = scmp.eq.s32.totalorder %s18, 0
      %p145 = por %p143, %p144
      %p146 = scmp.ne.s32.totalorder %s132, %s133
      %p147 = scmp.eq.s32.totalorder %s19, 7
      %p148 = por %p146, %p147
      %p150 = scmp.ne.s32.totalorder %s133, %s149
      %p151 = scmp.eq.s32.totalorder %s19, 0
      %p152 = por %p150, %p151
      %p153 = scmp.le.s32.totalorder 1, %s13
      %p154 = scmp.lt.s32.totalorder %s13, 9
      %p155 = pnand %p153, %p154
      %p156 = pneg %p155
      // Predicated region
      $region9: #{tpu_custom_call.1} parent=5 // pred_check
        _
      $region10: #{tpu_custom_call.1} parent=5 // pred_check_branch
        %158 = sbr.rel (%p155) target = $region12
      $region11: #{tpu_custom_call.1} parent=5 // pred_region
        %s159 = ssub.s32 %s13, 1
        // Predicated region
        $region13: #{tpu_custom_call.1} parent=11 // pred_check
          %p160 = pneg %p98
        $region14: #{tpu_custom_call.1} parent=11 // pred_check_branch
          %162 = sbr.rel (%p160) target = $region16
        $region15: #{tpu_custom_call.1} parent=11 // pred_region
          _
        $region16: #{tpu_custom_call.1} parent=11 // pred_fallthru
          _
        // Predicated region
        $region17: #{tpu_custom_call.1} parent=11 // pred_check
          %p163 = pneg %p119
        $region18: #{tpu_custom_call.1} parent=11 // pred_check_branch
          %165 = sbr.rel (%p163) target = $region20
        $region19: #{tpu_custom_call.1} parent=11 // pred_region
          _
        $region20: #{tpu_custom_call.1} parent=11 // pred_fallthru
          _
      $region12: #{tpu_custom_call.1} parent=5 // pred_fallthru
        _
      %p166 = scmp.lt.s32.totalorder %s13, 8
      // Predicated region
      $region21: #{tpu_custom_call.1} parent=5 // pred_check
        %p167 = pneg %p166
      $region22: #{tpu_custom_call.1} parent=5 // pred_check_branch
        %169 = sbr.rel (%p167) target = $region24
      $region23: #{tpu_custom_call.1} parent=5 // pred_region
        // Predicated region
        $region25: #{tpu_custom_call.1} parent=23 // pred_check
          %p170 = pneg %p45
        $region26: #{tpu_custom_call.1} parent=23 // pred_check_branch
          %172 = sbr.rel (%p170) target = $region28
        $region27: #{tpu_custom_call.1} parent=23 // pred_region
          %s173 = smul.u32 16, %s20
          %p174 = scmp.lt.s32.totalorder %s173, 31
          %s175 = scalar_select %p174, %s173, 31
          %s176 = smul.addr %s175, 8
          %s177 = scalar_lea.vmem %s0, %s176
          %s178 = smul.u32 16, %s20
        $region28: #{tpu_custom_call.1} parent=23 // pred_fallthru
          _
        // Predicated region
        $region29: #{tpu_custom_call.1} parent=23 // pred_check
          %p179 = pneg %p71
        $region30: #{tpu_custom_call.1} parent=23 // pred_check_branch
          %181 = sbr.rel (%p179) target = $region32
        $region31: #{tpu_custom_call.1} parent=23 // pred_region
          %s182 = smul.u32 16, %s21
          %p183 = scmp.lt.s32.totalorder %s182, 63
          %s184 = scalar_select %p183, %s182, 63
          %s185 = smul.addr %s184, 4
          %s186 = scalar_lea.vmem %s1, %s185
          %s187 = smul.u32 16, %s21
        $region32: #{tpu_custom_call.1} parent=23 // pred_fallthru
          _
      $region24: #{tpu_custom_call.1} parent=5 // pred_fallthru
        _
      %p188 = scmp.le.s32.totalorder 1, %s13
      %p189 = scmp.lt.s32.totalorder %s13, 9
      %p190 = pnand %p188, %p189
      %p191 = pneg %p190
      // Predicated region
      $region33: #{tpu_custom_call.1} parent=5 // pred_check
        _
      $region34: #{tpu_custom_call.1} parent=5 // pred_check_branch
        %193 = sbr.rel (%p190) target = $region36
      $region35: #{tpu_custom_call.1} parent=5 // pred_region
        %s194 = ssub.s32 %s13, 1
        %s195 = smul.u32 16, %s22
        %p196 = scmp.lt.s32.totalorder %s195, 31
        %s197 = scalar_select %p196, %s195, 31
        %s198 = smul.addr %s197, 8
        %s199 = scalar_lea.vmem %s0, %s198
        %p200 = pneg %p51
        %p201 = pneg %p48
        %s202 = smul.u32 16, %s23
        %p203 = scmp.lt.s32.totalorder %s202, 63
        %s204 = scalar_select %p203, %s202, 63
        %s205 = smul.addr %s204, 4
        %s206 = scalar_lea.vmem %s1, %s205
        %p207 = pneg %p77
        %p208 = pneg %p74
        %p209 = pneg %p98
        %p210 = pneg %p95
        %p211 = pneg %p119
        %p212 = pneg %p116
        %p213 = pneg %p145
        %p214 = pneg %p142
        %s215 = sand.u32 %s132, 1
        %s216 = scalar_lea.sflag [#allocation4], %s215
        %s217 = sand.u32 %s132, 1
        %s218 = smul.addr %s217, 128
        %s219 = scalar_lea.vmem [#allocation3], %s218
        %s220 = smul.u32 16, %s22
        %p221 = scmp.lt.s32.totalorder %s220, 31
        %s222 = scalar_select %p221, %s220, 31
        %s223 = smul.addr %s222, 8
        %s224 = scalar_lea.vmem %s0, %s223
        %s225 = smul.u32 16, %s22
        %s226 = smul.u32 16, %s23
        %p227 = scmp.lt.s32.totalorder %s226, 63
        %s228 = scalar_select %p227, %s226, 63
        %s229 = smul.addr %s228, 4
        %s230 = scalar_lea.vmem %s1, %s229
        %s231 = smul.u32 16, %s23
        %s232 = smul.u32 16, %s22
        %p234 = scmp.eq.s32.totalorder %s23, 0
        // Predicated region
        $region37: #{tpu_custom_call.1} parent=35 // pred_check
          %p235 = pneg %p234
        $region38: #{tpu_custom_call.1} parent=35 // pred_check_branch
          %237 = sbr.rel (%p235) target = $region40
        $region39: #{tpu_custom_call.1} parent=35 // pred_region
          %vm238 = vcmask 523264
          %239 = vst.msk [vmem:[#allocation2] sm:$0xff] %vm238, 0.0
          %240 = vst.msk [vmem:[#allocation2 + $0x8] sm:$0xff] %vm238, 0.0
          %241 = vst.msk [vmem:[#allocation2 + $0x10] sm:$0xff] %vm238, 0.0
          %242 = vst.msk [vmem:[#allocation2 + $0x18] sm:$0xff] %vm238, 0.0
          %243 = vst.msk [vmem:[#allocation2 + $0x20] sm:$0xff] %vm238, 0.0
          %244 = vst.msk [vmem:[#allocation2 + $0x28] sm:$0xff] %vm238, 0.0
          %245 = vst.msk [vmem:[#allocation2 + $0x30] sm:$0xff] %vm238, 0.0
          %246 = vst.msk [vmem:[#allocation2 + $0x38] sm:$0xff] %vm238, 0.0
          %247 = vst.msk [vmem:[#allocation2 + $0x40] sm:$0xff] %vm238, 0.0
          %248 = vst.msk [vmem:[#allocation2 + $0x48] sm:$0xff] %vm238, 0.0
          %249 = vst.msk [vmem:[#allocation2 + $0x50] sm:$0xff] %vm238, 0.0
          %250 = vst.msk [vmem:[#allocation2 + $0x58] sm:$0xff] %vm238, 0.0
          %251 = vst.msk [vmem:[#allocation2 + $0x60] sm:$0xff] %vm238, 0.0
          %252 = vst.msk [vmem:[#allocation2 + $0x68] sm:$0xff] %vm238, 0.0
          %253 = vst.msk [vmem:[#allocation2 + $0x70] sm:$0xff] %vm238, 0.0
          %254 = vst.msk [vmem:[#allocation2 + $0x78] sm:$0xff] %vm238, 0.0
        $region40: #{tpu_custom_call.1} parent=35 // pred_fallthru
          _
        %v255 = vld [vmem:[%s224] sm:$0xff]
        %v256 = vld [vmem:[%s224 + $0x8] sm:$0xff]
        %v257 = vld [vmem:[%s224 + $0x10] sm:$0xff]
        %v258 = vld [vmem:[%s224 + $0x18] sm:$0xff]
        %v259 = vld [vmem:[%s224 + $0x20] sm:$0xff]
        %v260 = vld [vmem:[%s224 + $0x28] sm:$0xff]
        %v261 = vld [vmem:[%s224 + $0x30] sm:$0xff]
        %v262 = vld [vmem:[%s224 + $0x38] sm:$0xff]
        %v263 = vld [vmem:[%s224 + $0x40] sm:$0xff]
        %v264 = vld [vmem:[%s224 + $0x48] sm:$0xff]
        %v265 = vld [vmem:[%s224 + $0x50] sm:$0xff]
        %v266 = vld [vmem:[%s224 + $0x58] sm:$0xff]
        %v267 = vld [vmem:[%s224 + $0x60] sm:$0xff]
        %v268 = vld [vmem:[%s224 + $0x68] sm:$0xff]
        %v269 = vld [vmem:[%s224 + $0x70] sm:$0xff]
        %v270 = vld [vmem:[%s224 + $0x78] sm:$0xff]
        %s271 = smul.u32 %s23, 128
        %v272 = vstv %s271
        %v273 = vsub.s32 %v255, %v272
        %v274 = vsub.s32 %v256, %v272
        %v275 = vsub.s32 %v257, %v272
        %v276 = vsub.s32 %v258, %v272
        %v277 = vsub.s32 %v259, %v272
        %v278 = vsub.s32 %v260, %v272
        %v279 = vsub.s32 %v261, %v272
        %v280 = vsub.s32 %v262, %v272
        %v281 = vsub.s32 %v263, %v272
        %v282 = vsub.s32 %v264, %v272
        %v283 = vsub.s32 %v265, %v272
        %v284 = vsub.s32 %v266, %v272
        %v285 = vsub.s32 %v267, %v272
        %v286 = vsub.s32 %v268, %v272
        %v287 = vsub.s32 %v269, %v272
        %v288 = vsub.s32 %v270, %v272
        %v289 = vlaneseq
        %v290 = vand.u32 %v289, 127
        %291 = vset.pattern.permute.xlu0 0
        %292 = vperm.xlu0 %291, %v273
        %v293 = vpop.permute.xlu0 %292
        %294 = vset.pattern.permute.xlu0 0
        %295 = vperm.xlu0 %294, %v274
        %v296 = vpop.permute.xlu0 %295
        %297 = vset.pattern.permute.xlu0 0
        %298 = vperm.xlu0 %297, %v275
        %v299 = vpop.permute.xlu0 %298
        %300 = vset.pattern.permute.xlu0 0
        %301 = vperm.xlu0 %300, %v276
        %v302 = vpop.permute.xlu0 %301
        %303 = vset.pattern.permute.xlu0 0
        %304 = vperm.xlu0 %303, %v277
        %v305 = vpop.permute.xlu0 %304
        %306 = vset.pattern.permute.xlu0 0
        %307 = vperm.xlu0 %306, %v278
        %v308 = vpop.permute.xlu0 %307
        %309 = vset.pattern.permute.xlu0 0
        %310 = vperm.xlu0 %309, %v279
        %v311 = vpop.permute.xlu0 %310
        %312 = vset.pattern.permute.xlu0 0
        %313 = vperm.xlu0 %312, %v280
        %v314 = vpop.permute.xlu0 %313
        %315 = vset.pattern.permute.xlu0 0
        %316 = vperm.xlu0 %315, %v281
        %v317 = vpop.permute.xlu0 %316
        %318 = vset.pattern.permute.xlu0 0
        %319 = vperm.xlu0 %318, %v282
        %v320 = vpop.permute.xlu0 %319
        %321 = vset.pattern.permute.xlu0 0
        %322 = vperm.xlu0 %321, %v283
        %v323 = vpop.permute.xlu0 %322
        %324 = vset.pattern.permute.xlu0 0
        %325 = vperm.xlu0 %324, %v284
        %v326 = vpop.permute.xlu0 %325
        %327 = vset.pattern.permute.xlu0 0
        %328 = vperm.xlu0 %327, %v285
        %v329 = vpop.permute.xlu0 %328
        %330 = vset.pattern.permute.xlu0 0
        %331 = vperm.xlu0 %330, %v286
        %v332 = vpop.permute.xlu0 %331
        %333 = vset.pattern.permute.xlu0 0
        %334 = vperm.xlu0 %333, %v287
        %v335 = vpop.permute.xlu0 %334
        %336 = vset.pattern.permute.xlu0 0
        %337 = vperm.xlu0 %336, %v288
        %v338 = vpop.permute.xlu0 %337
        %vm339 = vcmp.eq.s32.totalorder %v293, %v290
        %vm340 = vcmp.eq.s32.totalorder %v296, %v290
        %vm341 = vcmp.eq.s32.totalorder %v299, %v290
        %vm342 = vcmp.eq.s32.totalorder %v302, %v290
        %vm343 = vcmp.eq.s32.totalorder %v305, %v290
        %vm344 = vcmp.eq.s32.totalorder %v308, %v290
        %vm345 = vcmp.eq.s32.totalorder %v311, %v290
        %vm346 = vcmp.eq.s32.totalorder %v314, %v290
        %vm347 = vcmp.eq.s32.totalorder %v317, %v290
        %vm348 = vcmp.eq.s32.totalorder %v320, %v290
        %vm349 = vcmp.eq.s32.totalorder %v323, %v290
        %vm350 = vcmp.eq.s32.totalorder %v326, %v290
        %vm351 = vcmp.eq.s32.totalorder %v329, %v290
        %vm352 = vcmp.eq.s32.totalorder %v332, %v290
        %vm353 = vcmp.eq.s32.totalorder %v335, %v290
        %vm354 = vcmp.eq.s32.totalorder %v338, %v290
        %v355 = vsel %vm339, 1, 0
        %v356 = vsel %vm340, 1, 0
        %v357 = vsel %vm341, 1, 0
        %v358 = vsel %vm342, 1, 0
        %v359 = vsel %vm343, 1, 0
        %v360 = vsel %vm344, 1, 0
        %v361 = vsel %vm345, 1, 0
        %v362 = vsel %vm346, 1, 0
        %v363 = vsel %vm347, 1, 0
        %v364 = vsel %vm348, 1, 0
        %v365 = vsel %vm349, 1, 0
        %v366 = vsel %vm350, 1, 0
        %v367 = vsel %vm351, 1, 0
        %v368 = vsel %vm352, 1, 0
        %v369 = vsel %vm353, 1, 0
        %v370 = vsel %vm354, 1, 0
        %v371 = vcvt.s32.f32 %v355
        %v372 = vcvt.s32.f32 %v356
        %v373 = vcvt.s32.f32 %v357
        %v374 = vcvt.s32.f32 %v358
        %v375 = vcvt.s32.f32 %v359
        %v376 = vcvt.s32.f32 %v360
        %v377 = vcvt.s32.f32 %v361
        %v378 = vcvt.s32.f32 %v362
        %v379 = vcvt.s32.f32 %v363
        %v380 = vcvt.s32.f32 %v364
        %v381 = vcvt.s32.f32 %v365
        %v382 = vcvt.s32.f32 %v366
        %v383 = vcvt.s32.f32 %v367
        %v384 = vcvt.s32.f32 %v368
        %v385 = vcvt.s32.f32 %v369
        %v386 = vcvt.s32.f32 %v370
        %v387 = vpack.c.bf16 %v372, %v371
        %v388 = vpack.c.bf16 %v374, %v373
        %v389 = vpack.c.bf16 %v376, %v375
        %v390 = vpack.c.bf16 %v378, %v377
        %v391 = vpack.c.bf16 %v380, %v379
        %v392 = vpack.c.bf16 %v382, %v381
        %v393 = vpack.c.bf16 %v384, %v383
        %v394 = vpack.c.bf16 %v386, %v385
        %v395 = vadd.bf16 %v387, 0
        %v396 = vadd.bf16 %v388, 0
        %v397 = vadd.bf16 %v389, 0
        %v398 = vadd.bf16 %v390, 0
        %v399 = vadd.bf16 %v391, 0
        %v400 = vadd.bf16 %v392, 0
        %v401 = vadd.bf16 %v393, 0
        %v402 = vadd.bf16 %v394, 0
        %403 = vset.pattern.permute.xlu0 1
        %404 = vperm.xlu0 %403, %v273
        %v405 = vpop.permute.xlu0 %404
        %406 = vset.pattern.permute.xlu0 1
        %407 = vperm.xlu0 %406, %v274
        %v408 = vpop.permute.xlu0 %407
        %409 = vset.pattern.permute.xlu0 1
        %410 = vperm.xlu0 %409, %v275
        %v411 = vpop.permute.xlu0 %410
        %412 = vset.pattern.permute.xlu0 1
        %413 = vperm.xlu0 %412, %v276
        %v414 = vpop.permute.xlu0 %413
        %415 = vset.pattern.permute.xlu0 1
        %416 = vperm.xlu0 %415, %v277
        %v417 = vpop.permute.xlu0 %416
        %418 = vset.pattern.permute.xlu0 1
        %419 = vperm.xlu0 %418, %v278
        %v420 = vpop.permute.xlu0 %419
        %421 = vset.pattern.permute.xlu0 1
        %422 = vperm.xlu0 %421, %v279
        %v423 = vpop.permute.xlu0 %422
        %424 = vset.pattern.permute.xlu0 1
        %425 = vperm.xlu0 %424, %v280
        %v426 = vpop.permute.xlu0 %425
        %427 = vset.pattern.permute.xlu0 1
        %428 = vperm.xlu0 %427, %v281
        %v429 = vpop.permute.xlu0 %428
        %430 = vset.pattern.permute.xlu0 1
        %431 = vperm.xlu0 %430, %v282
        %v432 = vpop.permute.xlu0 %431
        %433 = vset.pattern.permute.xlu0 1
        %434 = vperm.xlu0 %433, %v283
        %v435 = vpop.permute.xlu0 %434
        %436 = vset.pattern.permute.xlu0 1
        %437 = vperm.xlu0 %436, %v284
        %v438 = vpop.permute.xlu0 %437
        %439 = vset.pattern.permute.xlu0 1
        %440 = vperm.xlu0 %439, %v285
        %v441 = vpop.permute.xlu0 %440
        %442 = vset.pattern.permute.xlu0 1
        %443 = vperm.xlu0 %442, %v286
        %v444 = vpop.permute.xlu0 %443
        %445 = vset.pattern.permute.xlu0 1
        %446 = vperm.xlu0 %445, %v287
        %v447 = vpop.permute.xlu0 %446
        %448 = vset.pattern.permute.xlu0 1
        %449 = vperm.xlu0 %448, %v288
        %v450 = vpop.permute.xlu0 %449
        %vm451 = vcmp.eq.s32.totalorder %v405, %v290
        %vm452 = vcmp.eq.s32.totalorder %v408, %v290
        %vm453 = vcmp.eq.s32.totalorder %v411, %v290
        %vm454 = vcmp.eq.s32.totalorder %v414, %v290
        %vm455 = vcmp.eq.s32.totalorder %v417, %v290
        %vm456 = vcmp.eq.s32.totalorder %v420, %v290
        %vm457 = vcmp.eq.s32.totalorder %v423, %v290
        %vm458 = vcmp.eq.s32.totalorder %v426, %v290
        %vm459 = vcmp.eq.s32.totalorder %v429, %v290
        %vm460 = vcmp.eq.s32.totalorder %v432, %v290
        %vm461 = vcmp.eq.s32.totalorder %v435, %v290
        %vm462 = vcmp.eq.s32.totalorder %v438, %v290
        %vm463 = vcmp.eq.s32.totalorder %v441, %v290
        %vm464 = vcmp.eq.s32.totalorder %v444, %v290
        %vm465 = vcmp.eq.s32.totalorder %v447, %v290
        %vm466 = vcmp.eq.s32.totalorder %v450, %v290
        %v467 = vsel %vm451, 1, 0
        %v468 = vsel %vm452, 1, 0
        %v469 = vsel %vm453, 1, 0
        %v470 = vsel %vm454, 1, 0
        %v471 = vsel %vm455, 1, 0
        %v472 = vsel %vm456, 1, 0
        %v473 = vsel %vm457, 1, 0
        %v474 = vsel %vm458, 1, 0
        %v475 = vsel %vm459, 1, 0
        %v476 = vsel %vm460, 1, 0
        %v477 = vsel %vm461, 1, 0
        %v478 = vsel %vm462, 1, 0
        %v479 = vsel %vm463, 1, 0
        %v480 = vsel %vm464, 1, 0
        %v481 = vsel %vm465, 1, 0
        %v482 = vsel %vm466, 1, 0
        %v483 = vcvt.s32.f32 %v467
        %v484 = vcvt.s32.f32 %v468
        %v485 = vcvt.s32.f32 %v469
        %v486 = vcvt.s32.f32 %v470
        %v487 = vcvt.s32.f32 %v471
        %v488 = vcvt.s32.f32 %v472
        %v489 = vcvt.s32.f32 %v473
        %v490 = vcvt.s32.f32 %v474
        %v491 = vcvt.s32.f32 %v475
        %v492 = vcvt.s32.f32 %v476
        %v493 = vcvt.s32.f32 %v477
        %v494 = vcvt.s32.f32 %v478
        %v495 = vcvt.s32.f32 %v479
        %v496 = vcvt.s32.f32 %v480
        %v497 = vcvt.s32.f32 %v481
        %v498 = vcvt.s32.f32 %v482
        %v499 = vpack.c.bf16 %v484, %v483
        %v500 = vpack.c.bf16 %v486, %v485
        %v501 = vpack.c.bf16 %v488, %v487
        %v502 = vpack.c.bf16 %v490, %v489
        %v503 = vpack.c.bf16 %v492, %v491
        %v504 = vpack.c.bf16 %v494, %v493
        %v505 = vpack.c.bf16 %v496, %v495
        %v506 = vpack.c.bf16 %v498, %v497
        %v507 = vadd.bf16 %v395, %v499
        %v508 = vadd.bf16 %v396, %v500
        %v509 = vadd.bf16 %v397, %v501
        %v510 = vadd.bf16 %v398, %v502
        %v511 = vadd.bf16 %v399, %v503
        %v512 = vadd.bf16 %v400, %v504
        %v513 = vadd.bf16 %v401, %v505
        %v514 = vadd.bf16 %v402, %v506
        %515 = vset.pattern.permute.xlu0 2
        %516 = vperm.xlu0 %515, %v273
        %v517 = vpop.permute.xlu0 %516
        %518 = vset.pattern.permute.xlu0 2
        %519 = vperm.xlu0 %518, %v274
        %v520 = vpop.permute.xlu0 %519
        %521 = vset.pattern.permute.xlu0 2
        %522 = vperm.xlu0 %521, %v275
        %v523 = vpop.permute.xlu0 %522
        %524 = vset.pattern.permute.xlu0 2
        %525 = vperm.xlu0 %524, %v276
        %v526 = vpop.permute.xlu0 %525
        %527 = vset.pattern.permute.xlu0 2
        %528 = vperm.xlu0 %527, %v277
        %v529 = vpop.permute.xlu0 %528
        %530 = vset.pattern.permute.xlu0 2
        %531 = vperm.xlu0 %530, %v278
        %v532 = vpop.permute.xlu0 %531
        %533 = vset.pattern.permute.xlu0 2
        %534 = vperm.xlu0 %533, %v279
        %v535 = vpop.permute.xlu0 %534
        %536 = vset.pattern.permute.xlu0 2
        %537 = vperm.xlu0 %536, %v280
        %v538 = vpop.permute.xlu0 %537
        %539 = vset.pattern.permute.xlu0 2
        %540 = vperm.xlu0 %539, %v281
        %v541 = vpop.permute.xlu0 %540
        %542 = vset.pattern.permute.xlu0 2
        %543 = vperm.xlu0 %542, %v282
        %v544 = vpop.permute.xlu0 %543
        %545 = vset.pattern.permute.xlu0 2
        %546 = vperm.xlu0 %545, %v283
        %v547 = vpop.permute.xlu0 %546
        %548 = vset.pattern.permute.xlu0 2
        %549 = vperm.xlu0 %548, %v284
        %v550 = vpop.permute.xlu0 %549
        %551 = vset.pattern.permute.xlu0 2
        %552 = vperm.xlu0 %551, %v285
        %v553 = vpop.permute.xlu0 %552
        %554 = vset.pattern.permute.xlu0 2
        %555 = vperm.xlu0 %554, %v286
        %v556 = vpop.permute.xlu0 %555
        %557 = vset.pattern.permute.xlu0 2
        %558 = vperm.xlu0 %557, %v287
        %v559 = vpop.permute.xlu0 %558
        %560 = vset.pattern.permute.xlu0 2
        %561 = vperm.xlu0 %560, %v288
        %v562 = vpop.permute.xlu0 %561
        %vm563 = vcmp.eq.s32.totalorder %v517, %v290
        %vm564 = vcmp.eq.s32.totalorder %v520, %v290
        %vm565 = vcmp.eq.s32.totalorder %v523, %v290
        %vm566 = vcmp.eq.s32.totalorder %v526, %v290
        %vm567 = vcmp.eq.s32.totalorder %v529, %v290
        %vm568 = vcmp.eq.s32.totalorder %v532, %v290
        %vm569 = vcmp.eq.s32.totalorder %v535, %v290
        %vm570 = vcmp.eq.s32.totalorder %v538, %v290
        %vm571 = vcmp.eq.s32.totalorder %v541, %v290
        %vm572 = vcmp.eq.s32.totalorder %v544, %v290
        %vm573 = vcmp.eq.s32.totalorder %v547, %v290
        %vm574 = vcmp.eq.s32.totalorder %v550, %v290
        %vm575 = vcmp.eq.s32.totalorder %v553, %v290
        %vm576 = vcmp.eq.s32.totalorder %v556, %v290
        %vm577 = vcmp.eq.s32.totalorder %v559, %v290
        %vm578 = vcmp.eq.s32.totalorder %v562, %v290
        %v579 = vsel %vm563, 1, 0
        %v580 = vsel %vm564, 1, 0
        %v581 = vsel %vm565, 1, 0
        %v582 = vsel %vm566, 1, 0
        %v583 = vsel %vm567, 1, 0
        %v584 = vsel %vm568, 1, 0
        %v585 = vsel %vm569, 1, 0
        %v586 = vsel %vm570, 1, 0
        %v587 = vsel %vm571, 1, 0
        %v588 = vsel %vm572, 1, 0
        %v589 = vsel %vm573, 1, 0
        %v590 = vsel %vm574, 1, 0
        %v591 = vsel %vm575, 1, 0
        %v592 = vsel %vm576, 1, 0
        %v593 = vsel %vm577, 1, 0
        %v594 = vsel %vm578, 1, 0
        %v595 = vcvt.s32.f32 %v579
        %v596 = vcvt.s32.f32 %v580
        %v597 = vcvt.s32.f32 %v581
        %v598 = vcvt.s32.f32 %v582
        %v599 = vcvt.s32.f32 %v583
        %v600 = vcvt.s32.f32 %v584
        %v601 = vcvt.s32.f32 %v585
        %v602 = vcvt.s32.f32 %v586
        %v603 = vcvt.s32.f32 %v587
        %v604 = vcvt.s32.f32 %v588
        %v605 = vcvt.s32.f32 %v589
        %v606 = vcvt.s32.f32 %v590
        %v607 = vcvt.s32.f32 %v591
        %v608 = vcvt.s32.f32 %v592
        %v609 = vcvt.s32.f32 %v593
        %v610 = vcvt.s32.f32 %v594
        %v611 = vpack.c.bf16 %v596, %v595
        %v612 = vpack.c.bf16 %v598, %v597
        %v613 = vpack.c.bf16 %v600, %v599
        %v614 = vpack.c.bf16 %v602, %v601
        %v615 = vpack.c.bf16 %v604, %v603
        %v616 = vpack.c.bf16 %v606, %v605
        %v617 = vpack.c.bf16 %v608, %v607
        %v618 = vpack.c.bf16 %v610, %v609
        %v619 = vadd.bf16 %v507, %v611
        %v620 = vadd.bf16 %v508, %v612
        %v621 = vadd.bf16 %v509, %v613
        %v622 = vadd.bf16 %v510, %v614
        %v623 = vadd.bf16 %v511, %v615
        %v624 = vadd.bf16 %v512, %v616
        %v625 = vadd.bf16 %v513, %v617
        %v626 = vadd.bf16 %v514, %v618
        %627 = vset.pattern.permute.xlu0 3
        %628 = vperm.xlu0 %627, %v273
        %v629 = vpop.permute.xlu0 %628
        %630 = vset.pattern.permute.xlu0 3
        %631 = vperm.xlu0 %630, %v274
        %v632 = vpop.permute.xlu0 %631
        %633 = vset.pattern.permute.xlu0 3
        %634 = vperm.xlu0 %633, %v275
        %v635 = vpop.permute.xlu0 %634
        %636 = vset.pattern.permute.xlu0 3
        %637 = vperm.xlu0 %636, %v276
        %v638 = vpop.permute.xlu0 %637
        %639 = vset.pattern.permute.xlu0 3
        %640 = vperm.xlu0 %639, %v277
        %v641 = vpop.permute.xlu0 %640
        %642 = vset.pattern.permute.xlu0 3
        %643 = vperm.xlu0 %642, %v278
        %v644 = vpop.permute.xlu0 %643
        %645 = vset.pattern.permute.xlu0 3
        %646 = vperm.xlu0 %645, %v279
        %v647 = vpop.permute.xlu0 %646
        %648 = vset.pattern.permute.xlu0 3
        %649 = vperm.xlu0 %648, %v280
        %v650 = vpop.permute.xlu0 %649
        %651 = vset.pattern.permute.xlu0 3
        %652 = vperm.xlu0 %651, %v281
        %v653 = vpop.permute.xlu0 %652
        %654 = vset.pattern.permute.xlu0 3
        %655 = vperm.xlu0 %654, %v282
        %v656 = vpop.permute.xlu0 %655
        %657 = vset.pattern.permute.xlu0 3
        %658 = vperm.xlu0 %657, %v283
        %v659 = vpop.permute.xlu0 %658
        %660 = vset.pattern.permute.xlu0 3
        %661 = vperm.xlu0 %660, %v284
        %v662 = vpop.permute.xlu0 %661
        %663 = vset.pattern.permute.xlu0 3
        %664 = vperm.xlu0 %663, %v285
        %v665 = vpop.permute.xlu0 %664
        %666 = vset.pattern.permute.xlu0 3
        %667 = vperm.xlu0 %666, %v286
        %v668 = vpop.permute.xlu0 %667
        %669 = vset.pattern.permute.xlu0 3
        %670 = vperm.xlu0 %669, %v287
        %v671 = vpop.permute.xlu0 %670
        %672 = vset.pattern.permute.xlu0 3
        %673 = vperm.xlu0 %672, %v288
        %v674 = vpop.permute.xlu0 %673
        %vm675 = vcmp.eq.s32.totalorder %v629, %v290
        %vm676 = vcmp.eq.s32.totalorder %v632, %v290
        %vm677 = vcmp.eq.s32.totalorder %v635, %v290
        %vm678 = vcmp.eq.s32.totalorder %v638, %v290
        %vm679 = vcmp.eq.s32.totalorder %v641, %v290
        %vm680 = vcmp.eq.s32.totalorder %v644, %v290
        %vm681 = vcmp.eq.s32.totalorder %v647, %v290
        %vm682 = vcmp.eq.s32.totalorder %v650, %v290
        %vm683 = vcmp.eq.s32.totalorder %v653, %v290
        %vm684 = vcmp.eq.s32.totalorder %v656, %v290
        %vm685 = vcmp.eq.s32.totalorder %v659, %v290
        %vm686 = vcmp.eq.s32.totalorder %v662, %v290
        %vm687 = vcmp.eq.s32.totalorder %v665, %v290
        %vm688 = vcmp.eq.s32.totalorder %v668, %v290
        %vm689 = vcmp.eq.s32.totalorder %v671, %v290
        %vm690 = vcmp.eq.s32.totalorder %v674, %v290
        %v691 = vsel %vm675, 1, 0
        %v692 = vsel %vm676, 1, 0
        %v693 = vsel %vm677, 1, 0
        %v694 = vsel %vm678, 1, 0
        %v695 = vsel %vm679, 1, 0
        %v696 = vsel %vm680, 1, 0
        %v697 = vsel %vm681, 1, 0
        %v698 = vsel %vm682, 1, 0
        %v699 = vsel %vm683, 1, 0
        %v700 = vsel %vm684, 1, 0
        %v701 = vsel %vm685, 1, 0
        %v702 = vsel %vm686, 1, 0
        %v703 = vsel %vm687, 1, 0
        %v704 = vsel %vm688, 1, 0
        %v705 = vsel %vm689, 1, 0
        %v706 = vsel %vm690, 1, 0
        %v707 = vcvt.s32.f32 %v691
        %v708 = vcvt.s32.f32 %v692
        %v709 = vcvt.s32.f32 %v693
        %v710 = vcvt.s32.f32 %v694
        %v711 = vcvt.s32.f32 %v695
        %v712 = vcvt.s32.f32 %v696
        %v713 = vcvt.s32.f32 %v697
        %v714 = vcvt.s32.f32 %v698
        %v715 = vcvt.s32.f32 %v699
        %v716 = vcvt.s32.f32 %v700
        %v717 = vcvt.s32.f32 %v701
        %v718 = vcvt.s32.f32 %v702
        %v719 = vcvt.s32.f32 %v703
        %v720 = vcvt.s32.f32 %v704
        %v721 = vcvt.s32.f32 %v705
        %v722 = vcvt.s32.f32 %v706
        %v723 = vpack.c.bf16 %v708, %v707
        %v724 = vpack.c.bf16 %v710, %v709
        %v725 = vpack.c.bf16 %v712, %v711
        %v726 = vpack.c.bf16 %v714, %v713
        %v727 = vpack.c.bf16 %v716, %v715
        %v728 = vpack.c.bf16 %v718, %v717
        %v729 = vpack.c.bf16 %v720, %v719
        %v730 = vpack.c.bf16 %v722, %v721
        %v731 = vadd.bf16 %v619, %v723
        %v732 = vadd.bf16 %v620, %v724
        %v733 = vadd.bf16 %v621, %v725
        %v734 = vadd.bf16 %v622, %v726
        %v735 = vadd.bf16 %v623, %v727
        %v736 = vadd.bf16 %v624, %v728
        %v737 = vadd.bf16 %v625, %v729
        %v738 = vadd.bf16 %v626, %v730
        %739 = vset.pattern.permute.xlu0 4
        %740 = vperm.xlu0 %739, %v273
        %v741 = vpop.permute.xlu0 %740
        %742 = vset.pattern.permute.xlu0 4
        %743 = vperm.xlu0 %742, %v274
        %v744 = vpop.permute.xlu0 %743
        %745 = vset.pattern.permute.xlu0 4
        %746 = vperm.xlu0 %745, %v275
        %v747 = vpop.permute.xlu0 %746
        %748 = vset.pattern.permute.xlu0 4
        %749 = vperm.xlu0 %748, %v276
        %v750 = vpop.permute.xlu0 %749
        %751 = vset.pattern.permute.xlu0 4
        %752 = vperm.xlu0 %751, %v277
        %v753 = vpop.permute.xlu0 %752
        %754 = vset.pattern.permute.xlu0 4
        %755 = vperm.xlu0 %754, %v278
        %v756 = vpop.permute.xlu0 %755
        %757 = vset.pattern.permute.xlu0 4
        %758 = vperm.xlu0 %757, %v279
        %v759 = vpop.permute.xlu0 %758
        %760 = vset.pattern.permute.xlu0 4
        %761 = vperm.xlu0 %760, %v280
        %v762 = vpop.permute.xlu0 %761
        %763 = vset.pattern.permute.xlu0 4
        %764 = vperm.xlu0 %763, %v281
        %v765 = vpop.permute.xlu0 %764
        %766 = vset.pattern.permute.xlu0 4
        %767 = vperm.xlu0 %766, %v282
        %v768 = vpop.permute.xlu0 %767
        %769 = vset.pattern.permute.xlu0 4
        %770 = vperm.xlu0 %769, %v283
        %v771 = vpop.permute.xlu0 %770
        %772 = vset.pattern.permute.xlu0 4
        %773 = vperm.xlu0 %772, %v284
        %v774 = vpop.permute.xlu0 %773
        %775 = vset.pattern.permute.xlu0 4
        %776 = vperm.xlu0 %775, %v285
        %v777 = vpop.permute.xlu0 %776
        %778 = vset.pattern.permute.xlu0 4
        %779 = vperm.xlu0 %778, %v286
        %v780 = vpop.permute.xlu0 %779
        %781 = vset.pattern.permute.xlu0 4
        %782 = vperm.xlu0 %781, %v287
        %v783 = vpop.permute.xlu0 %782
        %784 = vset.pattern.permute.xlu0 4
        %785 = vperm.xlu0 %784, %v288
        %v786 = vpop.permute.xlu0 %785
        %vm787 = vcmp.eq.s32.totalorder %v741, %v290
        %vm788 = vcmp.eq.s32.totalorder %v744, %v290
        %vm789 = vcmp.eq.s32.totalorder %v747, %v290
        %vm790 = vcmp.eq.s32.totalorder %v750, %v290
        %vm791 = vcmp.eq.s32.totalorder %v753, %v290
        %vm792 = vcmp.eq.s32.totalorder %v756, %v290
        %vm793 = vcmp.eq.s32.totalorder %v759, %v290
        %vm794 = vcmp.eq.s32.totalorder %v762, %v290
        %vm795 = vcmp.eq.s32.totalorder %v765, %v290
        %vm796 = vcmp.eq.s32.totalorder %v768, %v290
        %vm797 = vcmp.eq.s32.totalorder %v771, %v290
        %vm798 = vcmp.eq.s32.totalorder %v774, %v290
        %vm799 = vcmp.eq.s32.totalorder %v777, %v290
        %vm800 = vcmp.eq.s32.totalorder %v780, %v290
        %vm801 = vcmp.eq.s32.totalorder %v783, %v290
        %vm802 = vcmp.eq.s32.totalorder %v786, %v290
        %v803 = vsel %vm787, 1, 0
        %v804 = vsel %vm788, 1, 0
        %v805 = vsel %vm789, 1, 0
        %v806 = vsel %vm790, 1, 0
        %v807 = vsel %vm791, 1, 0
        %v808 = vsel %vm792, 1, 0
        %v809 = vsel %vm793, 1, 0
        %v810 = vsel %vm794, 1, 0
        %v811 = vsel %vm795, 1, 0
        %v812 = vsel %vm796, 1, 0
        %v813 = vsel %vm797, 1, 0
        %v814 = vsel %vm798, 1, 0
        %v815 = vsel %vm799, 1, 0
        %v816 = vsel %vm800, 1, 0
        %v817 = vsel %vm801, 1, 0
        %v818 = vsel %vm802, 1, 0
        %v819 = vcvt.s32.f32 %v803
        %v820 = vcvt.s32.f32 %v804
        %v821 = vcvt.s32.f32 %v805
        %v822 = vcvt.s32.f32 %v806
        %v823 = vcvt.s32.f32 %v807
        %v824 = vcvt.s32.f32 %v808
        %v825 = vcvt.s32.f32 %v809
        %v826 = vcvt.s32.f32 %v810
        %v827 = vcvt.s32.f32 %v811
        %v828 = vcvt.s32.f32 %v812
        %v829 = vcvt.s32.f32 %v813
        %v830 = vcvt.s32.f32 %v814
        %v831 = vcvt.s32.f32 %v815
        %v832 = vcvt.s32.f32 %v816
        %v833 = vcvt.s32.f32 %v817
        %v834 = vcvt.s32.f32 %v818
        %v835 = vpack.c.bf16 %v820, %v819
        %v836 = vpack.c.bf16 %v822, %v821
        %v837 = vpack.c.bf16 %v824, %v823
        %v838 = vpack.c.bf16 %v826, %v825
        %v839 = vpack.c.bf16 %v828, %v827
        %v840 = vpack.c.bf16 %v830, %v829
        %v841 = vpack.c.bf16 %v832, %v831
        %v842 = vpack.c.bf16 %v834, %v833
        %v843 = vadd.bf16 %v731, %v835
        %v844 = vadd.bf16 %v732, %v836
        %v845 = vadd.bf16 %v733, %v837
        %v846 = vadd.bf16 %v734, %v838
        %v847 = vadd.bf16 %v735, %v839
        %v848 = vadd.bf16 %v736, %v840
        %v849 = vadd.bf16 %v737, %v841
        %v850 = vadd.bf16 %v738, %v842
        %851 = vset.pattern.permute.xlu0 5
        %852 = vperm.xlu0 %851, %v273
        %v853 = vpop.permute.xlu0 %852
        %854 = vset.pattern.permute.xlu0 5
        %855 = vperm.xlu0 %854, %v274
        %v856 = vpop.permute.xlu0 %855
        %857 = vset.pattern.permute.xlu0 5
        %858 = vperm.xlu0 %857, %v275
        %v859 = vpop.permute.xlu0 %858
        %860 = vset.pattern.permute.xlu0 5
        %861 = vperm.xlu0 %860, %v276
        %v862 = vpop.permute.xlu0 %861
        %863 = vset.pattern.permute.xlu0 5
        %864 = vperm.xlu0 %863, %v277
        %v865 = vpop.permute.xlu0 %864
        %866 = vset.pattern.permute.xlu0 5
        %867 = vperm.xlu0 %866, %v278
        %v868 = vpop.permute.xlu0 %867
        %869 = vset.pattern.permute.xlu0 5
        %870 = vperm.xlu0 %869, %v279
        %v871 = vpop.permute.xlu0 %870
        %872 = vset.pattern.permute.xlu0 5
        %873 = vperm.xlu0 %872, %v280
        %v874 = vpop.permute.xlu0 %873
        %875 = vset.pattern.permute.xlu0 5
        %876 = vperm.xlu0 %875, %v281
        %v877 = vpop.permute.xlu0 %876
        %878 = vset.pattern.permute.xlu0 5
        %879 = vperm.xlu0 %878, %v282
        %v880 = vpop.permute.xlu0 %879
        %881 = vset.pattern.permute.xlu0 5
        %882 = vperm.xlu0 %881, %v283
        %v883 = vpop.permute.xlu0 %882
        %884 = vset.pattern.permute.xlu0 5
        %885 = vperm.xlu0 %884, %v284
        %v886 = vpop.permute.xlu0 %885
        %887 = vset.pattern.permute.xlu0 5
        %888 = vperm.xlu0 %887, %v285
        %v889 = vpop.permute.xlu0 %888
        %890 = vset.pattern.permute.xlu0 5
        %891 = vperm.xlu0 %890, %v286
        %v892 = vpop.permute.xlu0 %891
        %893 = vset.pattern.permute.xlu0 5
        %894 = vperm.xlu0 %893, %v287
        %v895 = vpop.permute.xlu0 %894
        %896 = vset.pattern.permute.xlu0 5
        %897 = vperm.xlu0 %896, %v288
        %v898 = vpop.permute.xlu0 %897
        %vm899 = vcmp.eq.s32.totalorder %v853, %v290
        %vm900 = vcmp.eq.s32.totalorder %v856, %v290
        %vm901 = vcmp.eq.s32.totalorder %v859, %v290
        %vm902 = vcmp.eq.s32.totalorder %v862, %v290
        %vm903 = vcmp.eq.s32.totalorder %v865, %v290
        %vm904 = vcmp.eq.s32.totalorder %v868, %v290
        %vm905 = vcmp.eq.s32.totalorder %v871, %v290
        %vm906 = vcmp.eq.s32.totalorder %v874, %v290
        %vm907 = vcmp.eq.s32.totalorder %v877, %v290
        %vm908 = vcmp.eq.s32.totalorder %v880, %v290
        %vm909 = vcmp.eq.s32.totalorder %v883, %v290
        %vm910 = vcmp.eq.s32.totalorder %v886, %v290
        %vm911 = vcmp.eq.s32.totalorder %v889, %v290
        %vm912 = vcmp.eq.s32.totalorder %v892, %v290
        %vm913 = vcmp.eq.s32.totalorder %v895, %v290
        %vm914 = vcmp.eq.s32.totalorder %v898, %v290
        %v915 = vsel %vm899, 1, 0
        %v916 = vsel %vm900, 1, 0
        %v917 = vsel %vm901, 1, 0
        %v918 = vsel %vm902, 1, 0
        %v919 = vsel %vm903, 1, 0
        %v920 = vsel %vm904, 1, 0
        %v921 = vsel %vm905, 1, 0
        %v922 = vsel %vm906, 1, 0
        %v923 = vsel %vm907, 1, 0
        %v924 = vsel %vm908, 1, 0
        %v925 = vsel %vm909, 1, 0
        %v926 = vsel %vm910, 1, 0
        %v927 = vsel %vm911, 1, 0
        %v928 = vsel %vm912, 1, 0
        %v929 = vsel %vm913, 1, 0
        %v930 = vsel %vm914, 1, 0
        %v931 = vcvt.s32.f32 %v915
        %v932 = vcvt.s32.f32 %v916
        %v933 = vcvt.s32.f32 %v917
        %v934 = vcvt.s32.f32 %v918
        %v935 = vcvt.s32.f32 %v919
        %v936 = vcvt.s32.f32 %v920
        %v937 = vcvt.s32.f32 %v921
        %v938 = vcvt.s32.f32 %v922
        %v939 = vcvt.s32.f32 %v923
        %v940 = vcvt.s32.f32 %v924
        %v941 = vcvt.s32.f32 %v925
        %v942 = vcvt.s32.f32 %v926
        %v943 = vcvt.s32.f32 %v927
        %v944 = vcvt.s32.f32 %v928
        %v945 = vcvt.s32.f32 %v929
        %v946 = vcvt.s32.f32 %v930
        %v947 = vpack.c.bf16 %v932, %v931
        %v948 = vpack.c.bf16 %v934, %v933
        %v949 = vpack.c.bf16 %v936, %v935
        %v950 = vpack.c.bf16 %v938, %v937
        %v951 = vpack.c.bf16 %v940, %v939
        %v952 = vpack.c.bf16 %v942, %v941
        %v953 = vpack.c.bf16 %v944, %v943
        %v954 = vpack.c.bf16 %v946, %v945
        %v955 = vadd.bf16 %v843, %v947
        %v956 = vadd.bf16 %v844, %v948
        %v957 = vadd.bf16 %v845, %v949
        %v958 = vadd.bf16 %v846, %v950
        %v959 = vadd.bf16 %v847, %v951
        %v960 = vadd.bf16 %v848, %v952
        %v961 = vadd.bf16 %v849, %v953
        %v962 = vadd.bf16 %v850, %v954
        %963 = vset.pattern.permute.xlu0 6
        %964 = vperm.xlu0 %963, %v273
        %v965 = vpop.permute.xlu0 %964
        %966 = vset.pattern.permute.xlu0 6
        %967 = vperm.xlu0 %966, %v274
        %v968 = vpop.permute.xlu0 %967
        %969 = vset.pattern.permute.xlu0 6
        %970 = vperm.xlu0 %969, %v275
        %v971 = vpop.permute.xlu0 %970
        %972 = vset.pattern.permute.xlu0 6
        %973 = vperm.xlu0 %972, %v276
        %v974 = vpop.permute.xlu0 %973
        %975 = vset.pattern.permute.xlu0 6
        %976 = vperm.xlu0 %975, %v277
        %v977 = vpop.permute.xlu0 %976
        %978 = vset.pattern.permute.xlu0 6
        %979 = vperm.xlu0 %978, %v278
        %v980 = vpop.permute.xlu0 %979
        %981 = vset.pattern.permute.xlu0 6
        %982 = vperm.xlu0 %981, %v279
        %v983 = vpop.permute.xlu0 %982
        %984 = vset.pattern.permute.xlu0 6
        %985 = vperm.xlu0 %984, %v280
        %v986 = vpop.permute.xlu0 %985
        %987 = vset.pattern.permute.xlu0 6
        %988 = vperm.xlu0 %987, %v281
        %v989 = vpop.permute.xlu0 %988
        %990 = vset.pattern.permute.xlu0 6
        %991 = vperm.xlu0 %990, %v282
        %v992 = vpop.permute.xlu0 %991
        %993 = vset.pattern.permute.xlu0 6
        %994 = vperm.xlu0 %993, %v283
        %v995 = vpop.permute.xlu0 %994
        %996 = vset.pattern.permute.xlu0 6
        %997 = vperm.xlu0 %996, %v284
        %v998 = vpop.permute.xlu0 %997
        %999 = vset.pattern.permute.xlu0 6
        %1000 = vperm.xlu0 %999, %v285
        %v1001 = vpop.permute.xlu0 %1000
        %1002 = vset.pattern.permute.xlu0 6
        %1003 = vperm.xlu0 %1002, %v286
        %v1004 = vpop.permute.xlu0 %1003
        %1005 = vset.pattern.permute.xlu0 6
        %1006 = vperm.xlu0 %1005, %v287
        %v1007 = vpop.permute.xlu0 %1006
        %1008 = vset.pattern.permute.xlu0 6
        %1009 = vperm.xlu0 %1008, %v288
        %v1010 = vpop.permute.xlu0 %1009
        %vm1011 = vcmp.eq.s32.totalorder %v965, %v290
        %vm1012 = vcmp.eq.s32.totalorder %v968, %v290
        %vm1013 = vcmp.eq.s32.totalorder %v971, %v290
        %vm1014 = vcmp.eq.s32.totalorder %v974, %v290
        %vm1015 = vcmp.eq.s32.totalorder %v977, %v290
        %vm1016 = vcmp.eq.s32.totalorder %v980, %v290
        %vm1017 = vcmp.eq.s32.totalorder %v983, %v290
        %vm1018 = vcmp.eq.s32.totalorder %v986, %v290
        %vm1019 = vcmp.eq.s32.totalorder %v989, %v290
        %vm1020 = vcmp.eq.s32.totalorder %v992, %v290
        %vm1021 = vcmp.eq.s32.totalorder %v995, %v290
        %vm1022 = vcmp.eq.s32.totalorder %v998, %v290
        %vm1023 = vcmp.eq.s32.totalorder %v1001, %v290
        %vm1024 = vcmp.eq.s32.totalorder %v1004, %v290
        %vm1025 = vcmp.eq.s32.totalorder %v1007, %v290
        %vm1026 = vcmp.eq.s32.totalorder %v1010, %v290
        %v1027 = vsel %vm1011, 1, 0
        %v1028 = vsel %vm1012, 1, 0
        %v1029 = vsel %vm1013, 1, 0
        %v1030 = vsel %vm1014, 1, 0
        %v1031 = vsel %vm1015, 1, 0
        %v1032 = vsel %vm1016, 1, 0
        %v1033 = vsel %vm1017, 1, 0
        %v1034 = vsel %vm1018, 1, 0
        %v1035 = vsel %vm1019, 1, 0
        %v1036 = vsel %vm1020, 1, 0
        %v1037 = vsel %vm1021, 1, 0
        %v1038 = vsel %vm1022, 1, 0
        %v1039 = vsel %vm1023, 1, 0
        %v1040 = vsel %vm1024, 1, 0
        %v1041 = vsel %vm1025, 1, 0
        %v1042 = vsel %vm1026, 1, 0
        %v1043 = vcvt.s32.f32 %v1027
        %v1044 = vcvt.s32.f32 %v1028
        %v1045 = vcvt.s32.f32 %v1029
        %v1046 = vcvt.s32.f32 %v1030
        %v1047 = vcvt.s32.f32 %v1031
        %v1048 = vcvt.s32.f32 %v1032
        %v1049 = vcvt.s32.f32 %v1033
        %v1050 = vcvt.s32.f32 %v1034
        %v1051 = vcvt.s32.f32 %v1035
        %v1052 = vcvt.s32.f32 %v1036
        %v1053 = vcvt.s32.f32 %v1037
        %v1054 = vcvt.s32.f32 %v1038
        %v1055 = vcvt.s32.f32 %v1039
        %v1056 = vcvt.s32.f32 %v1040
        %v1057 = vcvt.s32.f32 %v1041
        %v1058 = vcvt.s32.f32 %v1042
        %v1059 = vpack.c.bf16 %v1044, %v1043
        %v1060 = vpack.c.bf16 %v1046, %v1045
        %v1061 = vpack.c.bf16 %v1048, %v1047
        %v1062 = vpack.c.bf16 %v1050, %v1049
        %v1063 = vpack.c.bf16 %v1052, %v1051
        %v1064 = vpack.c.bf16 %v1054, %v1053
        %v1065 = vpack.c.bf16 %v1056, %v1055
        %v1066 = vpack.c.bf16 %v1058, %v1057
        %v1067 = vadd.bf16 %v955, %v1059
        %v1068 = vadd.bf16 %v956, %v1060
        %v1069 = vadd.bf16 %v957, %v1061
        %v1070 = vadd.bf16 %v958, %v1062
        %v1071 = vadd.bf16 %v959, %v1063
        %v1072 = vadd.bf16 %v960, %v1064
        %v1073 = vadd.bf16 %v961, %v1065
        %v1074 = vadd.bf16 %v962, %v1066
        %1075 = vset.pattern.permute.xlu0 7
        %1076 = vperm.xlu0 %1075, %v273
        %v1077 = vpop.permute.xlu0 %1076
        %1078 = vset.pattern.permute.xlu0 7
        %1079 = vperm.xlu0 %1078, %v274
        %v1080 = vpop.permute.xlu0 %1079
        %1081 = vset.pattern.permute.xlu0 7
        %1082 = vperm.xlu0 %1081, %v275
        %v1083 = vpop.permute.xlu0 %1082
        %1084 = vset.pattern.permute.xlu0 7
        %1085 = vperm.xlu0 %1084, %v276
        %v1086 = vpop.permute.xlu0 %1085
        %1087 = vset.pattern.permute.xlu0 7
        %1088 = vperm.xlu0 %1087, %v277
        %v1089 = vpop.permute.xlu0 %1088
        %1090 = vset.pattern.permute.xlu0 7
        %1091 = vperm.xlu0 %1090, %v278
        %v1092 = vpop.permute.xlu0 %1091
        %1093 = vset.pattern.permute.xlu0 7
        %1094 = vperm.xlu0 %1093, %v279
        %v1095 = vpop.permute.xlu0 %1094
        %1096 = vset.pattern.permute.xlu0 7
        %1097 = vperm.xlu0 %1096, %v280
        %v1098 = vpop.permute.xlu0 %1097
        %1099 = vset.pattern.permute.xlu0 7
        %1100 = vperm.xlu0 %1099, %v281
        %v1101 = vpop.permute.xlu0 %1100
        %1102 = vset.pattern.permute.xlu0 7
        %1103 = vperm.xlu0 %1102, %v282
        %v1104 = vpop.permute.xlu0 %1103
        %1105 = vset.pattern.permute.xlu0 7
        %1106 = vperm.xlu0 %1105, %v283
        %v1107 = vpop.permute.xlu0 %1106
        %1108 = vset.pattern.permute.xlu0 7
        %1109 = vperm.xlu0 %1108, %v284
        %v1110 = vpop.permute.xlu0 %1109
        %1111 = vset.pattern.permute.xlu0 7
        %1112 = vperm.xlu0 %1111, %v285
        %v1113 = vpop.permute.xlu0 %1112
        %1114 = vset.pattern.permute.xlu0 7
        %1115 = vperm.xlu0 %1114, %v286
        %v1116 = vpop.permute.xlu0 %1115
        %1117 = vset.pattern.permute.xlu0 7
        %1118 = vperm.xlu0 %1117, %v287
        %v1119 = vpop.permute.xlu0 %1118
        %1120 = vset.pattern.permute.xlu0 7
        %1121 = vperm.xlu0 %1120, %v288
        %v1122 = vpop.permute.xlu0 %1121
        %vm1123 = vcmp.eq.s32.totalorder %v1077, %v290
        %vm1124 = vcmp.eq.s32.totalorder %v1080, %v290
        %vm1125 = vcmp.eq.s32.totalorder %v1083, %v290
        %vm1126 = vcmp.eq.s32.totalorder %v1086, %v290
        %vm1127 = vcmp.eq.s32.totalorder %v1089, %v290
        %vm1128 = vcmp.eq.s32.totalorder %v1092, %v290
        %vm1129 = vcmp.eq.s32.totalorder %v1095, %v290
        %vm1130 = vcmp.eq.s32.totalorder %v1098, %v290
        %vm1131 = vcmp.eq.s32.totalorder %v1101, %v290
        %vm1132 = vcmp.eq.s32.totalorder %v1104, %v290
        %vm1133 = vcmp.eq.s32.totalorder %v1107, %v290
        %vm1134 = vcmp.eq.s32.totalorder %v1110, %v290
        %vm1135 = vcmp.eq.s32.totalorder %v1113, %v290
        %vm1136 = vcmp.eq.s32.totalorder %v1116, %v290
        %vm1137 = vcmp.eq.s32.totalorder %v1119, %v290
        %vm1138 = vcmp.eq.s32.totalorder %v1122, %v290
        %v1139 = vsel %vm1123, 1, 0
        %v1140 = vsel %vm1124, 1, 0
        %v1141 = vsel %vm1125, 1, 0
        %v1142 = vsel %vm1126, 1, 0
        %v1143 = vsel %vm1127, 1, 0
        %v1144 = vsel %vm1128, 1, 0
        %v1145 = vsel %vm1129, 1, 0
        %v1146 = vsel %vm1130, 1, 0
        %v1147 = vsel %vm1131, 1, 0
        %v1148 = vsel %vm1132, 1, 0
        %v1149 = vsel %vm1133, 1, 0
        %v1150 = vsel %vm1134, 1, 0
        %v1151 = vsel %vm1135, 1, 0
        %v1152 = vsel %vm1136, 1, 0
        %v1153 = vsel %vm1137, 1, 0
        %v1154 = vsel %vm1138, 1, 0
        %v1155 = vcvt.s32.f32 %v1139
        %v1156 = vcvt.s32.f32 %v1140
        %v1157 = vcvt.s32.f32 %v1141
        %v1158 = vcvt.s32.f32 %v1142
        %v1159 = vcvt.s32.f32 %v1143
        %v1160 = vcvt.s32.f32 %v1144
        %v1161 = vcvt.s32.f32 %v1145
        %v1162 = vcvt.s32.f32 %v1146
        %v1163 = vcvt.s32.f32 %v1147
        %v1164 = vcvt.s32.f32 %v1148
        %v1165 = vcvt.s32.f32 %v1149
        %v1166 = vcvt.s32.f32 %v1150
        %v1167 = vcvt.s32.f32 %v1151
        %v1168 = vcvt.s32.f32 %v1152
        %v1169 = vcvt.s32.f32 %v1153
        %v1170 = vcvt.s32.f32 %v1154
        %v1171 = vpack.c.bf16 %v1156, %v1155
        %v1172 = vpack.c.bf16 %v1158, %v1157
        %v1173 = vpack.c.bf16 %v1160, %v1159
        %v1174 = vpack.c.bf16 %v1162, %v1161
        %v1175 = vpack.c.bf16 %v1164, %v1163
        %v1176 = vpack.c.bf16 %v1166, %v1165
        %v1177 = vpack.c.bf16 %v1168, %v1167
        %v1178 = vpack.c.bf16 %v1170, %v1169
        %v1179 = vadd.bf16 %v1067, %v1171
        %v1180 = vadd.bf16 %v1068, %v1172
        %v1181 = vadd.bf16 %v1069, %v1173
        %v1182 = vadd.bf16 %v1070, %v1174
        %v1183 = vadd.bf16 %v1071, %v1175
        %v1184 = vadd.bf16 %v1072, %v1176
        %v1185 = vadd.bf16 %v1073, %v1177
        %v1186 = vadd.bf16 %v1074, %v1178
        %1187 = vset.pattern.permute.xlu0 8
        %1188 = vperm.xlu0 %1187, %v273
        %v1189 = vpop.permute.xlu0 %1188
        %1190 = vset.pattern.permute.xlu0 8
        %1191 = vperm.xlu0 %1190, %v274
        %v1192 = vpop.permute.xlu0 %1191
        %1193 = vset.pattern.permute.xlu0 8
        %1194 = vperm.xlu0 %1193, %v275
        %v1195 = vpop.permute.xlu0 %1194
        %1196 = vset.pattern.permute.xlu0 8
        %1197 = vperm.xlu0 %1196, %v276
        %v1198 = vpop.permute.xlu0 %1197
        %1199 = vset.pattern.permute.xlu0 8
        %1200 = vperm.xlu0 %1199, %v277
        %v1201 = vpop.permute.xlu0 %1200
        %1202 = vset.pattern.permute.xlu0 8
        %1203 = vperm.xlu0 %1202, %v278
        %v1204 = vpop.permute.xlu0 %1203
        %1205 = vset.pattern.permute.xlu0 8
        %1206 = vperm.xlu0 %1205, %v279
        %v1207 = vpop.permute.xlu0 %1206
        %1208 = vset.pattern.permute.xlu0 8
        %1209 = vperm.xlu0 %1208, %v280
        %v1210 = vpop.permute.xlu0 %1209
        %1211 = vset.pattern.permute.xlu0 8
        %1212 = vperm.xlu0 %1211, %v281
        %v1213 = vpop.permute.xlu0 %1212
        %1214 = vset.pattern.permute.xlu0 8
        %1215 = vperm.xlu0 %1214, %v282
        %v1216 = vpop.permute.xlu0 %1215
        %1217 = vset.pattern.permute.xlu0 8
        %1218 = vperm.xlu0 %1217, %v283
        %v1219 = vpop.permute.xlu0 %1218
        %1220 = vset.pattern.permute.xlu0 8
        %1221 = vperm.xlu0 %1220, %v284
        %v1222 = vpop.permute.xlu0 %1221
        %1223 = vset.pattern.permute.xlu0 8
        %1224 = vperm.xlu0 %1223, %v285
        %v1225 = vpop.permute.xlu0 %1224
        %1226 = vset.pattern.permute.xlu0 8
        %1227 = vperm.xlu0 %1226, %v286
        %v1228 = vpop.permute.xlu0 %1227
        %1229 = vset.pattern.permute.xlu0 8
        %1230 = vperm.xlu0 %1229, %v287
        %v1231 = vpop.permute.xlu0 %1230
        %1232 = vset.pattern.permute.xlu0 8
        %1233 = vperm.xlu0 %1232, %v288
        %v1234 = vpop.permute.xlu0 %1233
        %vm1235 = vcmp.eq.s32.totalorder %v1189, %v290
        %vm1236 = vcmp.eq.s32.totalorder %v1192, %v290
        %vm1237 = vcmp.eq.s32.totalorder %v1195, %v290
        %vm1238 = vcmp.eq.s32.totalorder %v1198, %v290
        %vm1239 = vcmp.eq.s32.totalorder %v1201, %v290
        %vm1240 = vcmp.eq.s32.totalorder %v1204, %v290
        %vm1241 = vcmp.eq.s32.totalorder %v1207, %v290
        %vm1242 = vcmp.eq.s32.totalorder %v1210, %v290
        %vm1243 = vcmp.eq.s32.totalorder %v1213, %v290
        %vm1244 = vcmp.eq.s32.totalorder %v1216, %v290
        %vm1245 = vcmp.eq.s32.totalorder %v1219, %v290
        %vm1246 = vcmp.eq.s32.totalorder %v1222, %v290
        %vm1247 = vcmp.eq.s32.totalorder %v1225, %v290
        %vm1248 = vcmp.eq.s32.totalorder %v1228, %v290
        %vm1249 = vcmp.eq.s32.totalorder %v1231, %v290
        %vm1250 = vcmp.eq.s32.totalorder %v1234, %v290
        %v1251 = vsel %vm1235, 1, 0
        %v1252 = vsel %vm1236, 1, 0
        %v1253 = vsel %vm1237, 1, 0
        %v1254 = vsel %vm1238, 1, 0
        %v1255 = vsel %vm1239, 1, 0
        %v1256 = vsel %vm1240, 1, 0
        %v1257 = vsel %vm1241, 1, 0
        %v1258 = vsel %vm1242, 1, 0
        %v1259 = vsel %vm1243, 1, 0
        %v1260 = vsel %vm1244, 1, 0
        %v1261 = vsel %vm1245, 1, 0
        %v1262 = vsel %vm1246, 1, 0
        %v1263 = vsel %vm1247, 1, 0
        %v1264 = vsel %vm1248, 1, 0
        %v1265 = vsel %vm1249, 1, 0
        %v1266 = vsel %vm1250, 1, 0
        %v1267 = vcvt.s32.f32 %v1251
        %v1268 = vcvt.s32.f32 %v1252
        %v1269 = vcvt.s32.f32 %v1253
        %v1270 = vcvt.s32.f32 %v1254
        %v1271 = vcvt.s32.f32 %v1255
        %v1272 = vcvt.s32.f32 %v1256
        %v1273 = vcvt.s32.f32 %v1257
        %v1274 = vcvt.s32.f32 %v1258
        %v1275 = vcvt.s32.f32 %v1259
        %v1276 = vcvt.s32.f32 %v1260
        %v1277 = vcvt.s32.f32 %v1261
        %v1278 = vcvt.s32.f32 %v1262
        %v1279 = vcvt.s32.f32 %v1263
        %v1280 = vcvt.s32.f32 %v1264
        %v1281 = vcvt.s32.f32 %v1265
        %v1282 = vcvt.s32.f32 %v1266
        %v1283 = vpack.c.bf16 %v1268, %v1267
        %v1284 = vpack.c.bf16 %v1270, %v1269
        %v1285 = vpack.c.bf16 %v1272, %v1271
        %v1286 = vpack.c.bf16 %v1274, %v1273
        %v1287 = vpack.c.bf16 %v1276, %v1275
        %v1288 = vpack.c.bf16 %v1278, %v1277
        %v1289 = vpack.c.bf16 %v1280, %v1279
        %v1290 = vpack.c.bf16 %v1282, %v1281
        %v1291 = vadd.bf16 %v1179, %v1283
        %v1292 = vadd.bf16 %v1180, %v1284
        %v1293 = vadd.bf16 %v1181, %v1285
        %v1294 = vadd.bf16 %v1182, %v1286
        %v1295 = vadd.bf16 %v1183, %v1287
        %v1296 = vadd.bf16 %v1184, %v1288
        %v1297 = vadd.bf16 %v1185, %v1289
        %v1298 = vadd.bf16 %v1186, %v1290
        %1299 = vset.pattern.permute.xlu0 9
        %1300 = vperm.xlu0 %1299, %v273
        %v1301 = vpop.permute.xlu0 %1300
        %1302 = vset.pattern.permute.xlu0 9
        %1303 = vperm.xlu0 %1302, %v274
        %v1304 = vpop.permute.xlu0 %1303
        %1305 = vset.pattern.permute.xlu0 9
        %1306 = vperm.xlu0 %1305, %v275
        %v1307 = vpop.permute.xlu0 %1306
        %1308 = vset.pattern.permute.xlu0 9
        %1309 = vperm.xlu0 %1308, %v276
        %v1310 = vpop.permute.xlu0 %1309
        %1311 = vset.pattern.permute.xlu0 9
        %1312 = vperm.xlu0 %1311, %v277
        %v1313 = vpop.permute.xlu0 %1312
        %1314 = vset.pattern.permute.xlu0 9
        %1315 = vperm.xlu0 %1314, %v278
        %v1316 = vpop.permute.xlu0 %1315
        %1317 = vset.pattern.permute.xlu0 9
        %1318 = vperm.xlu0 %1317, %v279
        %v1319 = vpop.permute.xlu0 %1318
        %1320 = vset.pattern.permute.xlu0 9
        %1321 = vperm.xlu0 %1320, %v280
        %v1322 = vpop.permute.xlu0 %1321
        %1323 = vset.pattern.permute.xlu0 9
        %1324 = vperm.xlu0 %1323, %v281
        %v1325 = vpop.permute.xlu0 %1324
        %1326 = vset.pattern.permute.xlu0 9
        %1327 = vperm.xlu0 %1326, %v282
        %v1328 = vpop.permute.xlu0 %1327
        %1329 = vset.pattern.permute.xlu0 9
        %1330 = vperm.xlu0 %1329, %v283
        %v1331 = vpop.permute.xlu0 %1330
        %1332 = vset.pattern.permute.xlu0 9
        %1333 = vperm.xlu0 %1332, %v284
        %v1334 = vpop.permute.xlu0 %1333
        %1335 = vset.pattern.permute.xlu0 9
        %1336 = vperm.xlu0 %1335, %v285
        %v1337 = vpop.permute.xlu0 %1336
        %1338 = vset.pattern.permute.xlu0 9
        %1339 = vperm.xlu0 %1338, %v286
        %v1340 = vpop.permute.xlu0 %1339
        %1341 = vset.pattern.permute.xlu0 9
        %1342 = vperm.xlu0 %1341, %v287
        %v1343 = vpop.permute.xlu0 %1342
        %1344 = vset.pattern.permute.xlu0 9
        %1345 = vperm.xlu0 %1344, %v288
        %v1346 = vpop.permute.xlu0 %1345
        %vm1347 = vcmp.eq.s32.totalorder %v1301, %v290
        %vm1348 = vcmp.eq.s32.totalorder %v1304, %v290
        %vm1349 = vcmp.eq.s32.totalorder %v1307, %v290
        %vm1350 = vcmp.eq.s32.totalorder %v1310, %v290
        %vm1351 = vcmp.eq.s32.totalorder %v1313, %v290
        %vm1352 = vcmp.eq.s32.totalorder %v1316, %v290
        %vm1353 = vcmp.eq.s32.totalorder %v1319, %v290
        %vm1354 = vcmp.eq.s32.totalorder %v1322, %v290
        %vm1355 = vcmp.eq.s32.totalorder %v1325, %v290
        %vm1356 = vcmp.eq.s32.totalorder %v1328, %v290
        %vm1357 = vcmp.eq.s32.totalorder %v1331, %v290
        %vm1358 = vcmp.eq.s32.totalorder %v1334, %v290
        %vm1359 = vcmp.eq.s32.totalorder %v1337, %v290
        %vm1360 = vcmp.eq.s32.totalorder %v1340, %v290
        %vm1361 = vcmp.eq.s32.totalorder %v1343, %v290
        %vm1362 = vcmp.eq.s32.totalorder %v1346, %v290
        %v1363 = vsel %vm1347, 1, 0
        %v1364 = vsel %vm1348, 1, 0
        %v1365 = vsel %vm1349, 1, 0
        %v1366 = vsel %vm1350, 1, 0
        %v1367 = vsel %vm1351, 1, 0
        %v1368 = vsel %vm1352, 1, 0
        %v1369 = vsel %vm1353, 1, 0
        %v1370 = vsel %vm1354, 1, 0
        %v1371 = vsel %vm1355, 1, 0
        %v1372 = vsel %vm1356, 1, 0
        %v1373 = vsel %vm1357, 1, 0
        %v1374 = vsel %vm1358, 1, 0
        %v1375 = vsel %vm1359, 1, 0
        %v1376 = vsel %vm1360, 1, 0
        %v1377 = vsel %vm1361, 1, 0
        %v1378 = vsel %vm1362, 1, 0
        %v1379 = vcvt.s32.f32 %v1363
        %v1380 = vcvt.s32.f32 %v1364
        %v1381 = vcvt.s32.f32 %v1365
        %v1382 = vcvt.s32.f32 %v1366
        %v1383 = vcvt.s32.f32 %v1367
        %v1384 = vcvt.s32.f32 %v1368
        %v1385 = vcvt.s32.f32 %v1369
        %v1386 = vcvt.s32.f32 %v1370
        %v1387 = vcvt.s32.f32 %v1371
        %v1388 = vcvt.s32.f32 %v1372
        %v1389 = vcvt.s32.f32 %v1373
        %v1390 = vcvt.s32.f32 %v1374
        %v1391 = vcvt.s32.f32 %v1375
        %v1392 = vcvt.s32.f32 %v1376
        %v1393 = vcvt.s32.f32 %v1377
        %v1394 = vcvt.s32.f32 %v1378
        %v1395 = vpack.c.bf16 %v1380, %v1379
        %v1396 = vpack.c.bf16 %v1382, %v1381
        %v1397 = vpack.c.bf16 %v1384, %v1383
        %v1398 = vpack.c.bf16 %v1386, %v1385
        %v1399 = vpack.c.bf16 %v1388, %v1387
        %v1400 = vpack.c.bf16 %v1390, %v1389
        %v1401 = vpack.c.bf16 %v1392, %v1391
        %v1402 = vpack.c.bf16 %v1394, %v1393
        %v1403 = vadd.bf16 %v1291, %v1395
        %v1404 = vadd.bf16 %v1292, %v1396
        %v1405 = vadd.bf16 %v1293, %v1397
        %v1406 = vadd.bf16 %v1294, %v1398
        %v1407 = vadd.bf16 %v1295, %v1399
        %v1408 = vadd.bf16 %v1296, %v1400
        %v1409 = vadd.bf16 %v1297, %v1401
        %v1410 = vadd.bf16 %v1298, %v1402
        %1411 = vset.pattern.permute.xlu0 10
        %1412 = vperm.xlu0 %1411, %v273
        %v1413 = vpop.permute.xlu0 %1412
        %1414 = vset.pattern.permute.xlu0 10
        %1415 = vperm.xlu0 %1414, %v274
        %v1416 = vpop.permute.xlu0 %1415
        %1417 = vset.pattern.permute.xlu0 10
        %1418 = vperm.xlu0 %1417, %v275
        %v1419 = vpop.permute.xlu0 %1418
        %1420 = vset.pattern.permute.xlu0 10
        %1421 = vperm.xlu0 %1420, %v276
        %v1422 = vpop.permute.xlu0 %1421
        %1423 = vset.pattern.permute.xlu0 10
        %1424 = vperm.xlu0 %1423, %v277
        %v1425 = vpop.permute.xlu0 %1424
        %1426 = vset.pattern.permute.xlu0 10
        %1427 = vperm.xlu0 %1426, %v278
        %v1428 = vpop.permute.xlu0 %1427
        %1429 = vset.pattern.permute.xlu0 10
        %1430 = vperm.xlu0 %1429, %v279
        %v1431 = vpop.permute.xlu0 %1430
        %1432 = vset.pattern.permute.xlu0 10
        %1433 = vperm.xlu0 %1432, %v280
        %v1434 = vpop.permute.xlu0 %1433
        %1435 = vset.pattern.permute.xlu0 10
        %1436 = vperm.xlu0 %1435, %v281
        %v1437 = vpop.permute.xlu0 %1436
        %1438 = vset.pattern.permute.xlu0 10
        %1439 = vperm.xlu0 %1438, %v282
        %v1440 = vpop.permute.xlu0 %1439
        %1441 = vset.pattern.permute.xlu0 10
        %1442 = vperm.xlu0 %1441, %v283
        %v1443 = vpop.permute.xlu0 %1442
        %1444 = vset.pattern.permute.xlu0 10
        %1445 = vperm.xlu0 %1444, %v284
        %v1446 = vpop.permute.xlu0 %1445
        %1447 = vset.pattern.permute.xlu0 10
        %1448 = vperm.xlu0 %1447, %v285
        %v1449 = vpop.permute.xlu0 %1448
        %1450 = vset.pattern.permute.xlu0 10
        %1451 = vperm.xlu0 %1450, %v286
        %v1452 = vpop.permute.xlu0 %1451
        %1453 = vset.pattern.permute.xlu0 10
        %1454 = vperm.xlu0 %1453, %v287
        %v1455 = vpop.permute.xlu0 %1454
        %1456 = vset.pattern.permute.xlu0 10
        %1457 = vperm.xlu0 %1456, %v288
        %v1458 = vpop.permute.xlu0 %1457
        %vm1459 = vcmp.eq.s32.totalorder %v1413, %v290
        %vm1460 = vcmp.eq.s32.totalorder %v1416, %v290
        %vm1461 = vcmp.eq.s32.totalorder %v1419, %v290
        %vm1462 = vcmp.eq.s32.totalorder %v1422, %v290
        %vm1463 = vcmp.eq.s32.totalorder %v1425, %v290
        %vm1464 = vcmp.eq.s32.totalorder %v1428, %v290
        %vm1465 = vcmp.eq.s32.totalorder %v1431, %v290
        %vm1466 = vcmp.eq.s32.totalorder %v1434, %v290
        %vm1467 = vcmp.eq.s32.totalorder %v1437, %v290
        %vm1468 = vcmp.eq.s32.totalorder %v1440, %v290
        %vm1469 = vcmp.eq.s32.totalorder %v1443, %v290
        %vm1470 = vcmp.eq.s32.totalorder %v1446, %v290
        %vm1471 = vcmp.eq.s32.totalorder %v1449, %v290
        %vm1472 = vcmp.eq.s32.totalorder %v1452, %v290
        %vm1473 = vcmp.eq.s32.totalorder %v1455, %v290
        %vm1474 = vcmp.eq.s32.totalorder %v1458, %v290
        %v1475 = vsel %vm1459, 1, 0
        %v1476 = vsel %vm1460, 1, 0
        %v1477 = vsel %vm1461, 1, 0
        %v1478 = vsel %vm1462, 1, 0
        %v1479 = vsel %vm1463, 1, 0
        %v1480 = vsel %vm1464, 1, 0
        %v1481 = vsel %vm1465, 1, 0
        %v1482 = vsel %vm1466, 1, 0
        %v1483 = vsel %vm1467, 1, 0
        %v1484 = vsel %vm1468, 1, 0
        %v1485 = vsel %vm1469, 1, 0
        %v1486 = vsel %vm1470, 1, 0
        %v1487 = vsel %vm1471, 1, 0
        %v1488 = vsel %vm1472, 1, 0
        %v1489 = vsel %vm1473, 1, 0
        %v1490 = vsel %vm1474, 1, 0
        %v1491 = vcvt.s32.f32 %v1475
        %v1492 = vcvt.s32.f32 %v1476
        %v1493 = vcvt.s32.f32 %v1477
        %v1494 = vcvt.s32.f32 %v1478
        %v1495 = vcvt.s32.f32 %v1479
        %v1496 = vcvt.s32.f32 %v1480
        %v1497 = vcvt.s32.f32 %v1481
        %v1498 = vcvt.s32.f32 %v1482
        %v1499 = vcvt.s32.f32 %v1483
        %v1500 = vcvt.s32.f32 %v1484
        %v1501 = vcvt.s32.f32 %v1485
        %v1502 = vcvt.s32.f32 %v1486
        %v1503 = vcvt.s32.f32 %v1487
        %v1504 = vcvt.s32.f32 %v1488
        %v1505 = vcvt.s32.f32 %v1489
        %v1506 = vcvt.s32.f32 %v1490
        %v1507 = vpack.c.bf16 %v1492, %v1491
        %v1508 = vpack.c.bf16 %v1494, %v1493
        %v1509 = vpack.c.bf16 %v1496, %v1495
        %v1510 = vpack.c.bf16 %v1498, %v1497
        %v1511 = vpack.c.bf16 %v1500, %v1499
        %v1512 = vpack.c.bf16 %v1502, %v1501
        %v1513 = vpack.c.bf16 %v1504, %v1503
        %v1514 = vpack.c.bf16 %v1506, %v1505
        %v1515 = vadd.bf16 %v1403, %v1507
        %v1516 = vadd.bf16 %v1404, %v1508
        %v1517 = vadd.bf16 %v1405, %v1509
        %v1518 = vadd.bf16 %v1406, %v1510
        %v1519 = vadd.bf16 %v1407, %v1511
        %v1520 = vadd.bf16 %v1408, %v1512
        %v1521 = vadd.bf16 %v1409, %v1513
        %v1522 = vadd.bf16 %v1410, %v1514
        %1523 = vset.pattern.permute.xlu0 11
        %1524 = vperm.xlu0 %1523, %v273
        %v1525 = vpop.permute.xlu0 %1524
        %1526 = vset.pattern.permute.xlu0 11
        %1527 = vperm.xlu0 %1526, %v274
        %v1528 = vpop.permute.xlu0 %1527
        %1529 = vset.pattern.permute.xlu0 11
        %1530 = vperm.xlu0 %1529, %v275
        %v1531 = vpop.permute.xlu0 %1530
        %1532 = vset.pattern.permute.xlu0 11
        %1533 = vperm.xlu0 %1532, %v276
        %v1534 = vpop.permute.xlu0 %1533
        %1535 = vset.pattern.permute.xlu0 11
        %1536 = vperm.xlu0 %1535, %v277
        %v1537 = vpop.permute.xlu0 %1536
        %1538 = vset.pattern.permute.xlu0 11
        %1539 = vperm.xlu0 %1538, %v278
        %v1540 = vpop.permute.xlu0 %1539
        %1541 = vset.pattern.permute.xlu0 11
        %1542 = vperm.xlu0 %1541, %v279
        %v1543 = vpop.permute.xlu0 %1542
        %1544 = vset.pattern.permute.xlu0 11
        %1545 = vperm.xlu0 %1544, %v280
        %v1546 = vpop.permute.xlu0 %1545
        %1547 = vset.pattern.permute.xlu0 11
        %1548 = vperm.xlu0 %1547, %v281
        %v1549 = vpop.permute.xlu0 %1548
        %1550 = vset.pattern.permute.xlu0 11
        %1551 = vperm.xlu0 %1550, %v282
        %v1552 = vpop.permute.xlu0 %1551
        %1553 = vset.pattern.permute.xlu0 11
        %1554 = vperm.xlu0 %1553, %v283
        %v1555 = vpop.permute.xlu0 %1554
        %1556 = vset.pattern.permute.xlu0 11
        %1557 = vperm.xlu0 %1556, %v284
        %v1558 = vpop.permute.xlu0 %1557
        %1559 = vset.pattern.permute.xlu0 11
        %1560 = vperm.xlu0 %1559, %v285
        %v1561 = vpop.permute.xlu0 %1560
        %1562 = vset.pattern.permute.xlu0 11
        %1563 = vperm.xlu0 %1562, %v286
        %v1564 = vpop.permute.xlu0 %1563
        %1565 = vset.pattern.permute.xlu0 11
        %1566 = vperm.xlu0 %1565, %v287
        %v1567 = vpop.permute.xlu0 %1566
        %1568 = vset.pattern.permute.xlu0 11
        %1569 = vperm.xlu0 %1568, %v288
        %v1570 = vpop.permute.xlu0 %1569
        %vm1571 = vcmp.eq.s32.totalorder %v1525, %v290
        %vm1572 = vcmp.eq.s32.totalorder %v1528, %v290
        %vm1573 = vcmp.eq.s32.totalorder %v1531, %v290
        %vm1574 = vcmp.eq.s32.totalorder %v1534, %v290
        %vm1575 = vcmp.eq.s32.totalorder %v1537, %v290
        %vm1576 = vcmp.eq.s32.totalorder %v1540, %v290
        %vm1577 = vcmp.eq.s32.totalorder %v1543, %v290
        %vm1578 = vcmp.eq.s32.totalorder %v1546, %v290
        %vm1579 = vcmp.eq.s32.totalorder %v1549, %v290
        %vm1580 = vcmp.eq.s32.totalorder %v1552, %v290
        %vm1581 = vcmp.eq.s32.totalorder %v1555, %v290
        %vm1582 = vcmp.eq.s32.totalorder %v1558, %v290
        %vm1583 = vcmp.eq.s32.totalorder %v1561, %v290
        %vm1584 = vcmp.eq.s32.totalorder %v1564, %v290
        %vm1585 = vcmp.eq.s32.totalorder %v1567, %v290
        %vm1586 = vcmp.eq.s32.totalorder %v1570, %v290
        %v1587 = vsel %vm1571, 1, 0
        %v1588 = vsel %vm1572, 1, 0
        %v1589 = vsel %vm1573, 1, 0
        %v1590 = vsel %vm1574, 1, 0
        %v1591 = vsel %vm1575, 1, 0
        %v1592 = vsel %vm1576, 1, 0
        %v1593 = vsel %vm1577, 1, 0
        %v1594 = vsel %vm1578, 1, 0
        %v1595 = vsel %vm1579, 1, 0
        %v1596 = vsel %vm1580, 1, 0
        %v1597 = vsel %vm1581, 1, 0
        %v1598 = vsel %vm1582, 1, 0
        %v1599 = vsel %vm1583, 1, 0
        %v1600 = vsel %vm1584, 1, 0
        %v1601 = vsel %vm1585, 1, 0
        %v1602 = vsel %vm1586, 1, 0
        %v1603 = vcvt.s32.f32 %v1587
        %v1604 = vcvt.s32.f32 %v1588
        %v1605 = vcvt.s32.f32 %v1589
        %v1606 = vcvt.s32.f32 %v1590
        %v1607 = vcvt.s32.f32 %v1591
        %v1608 = vcvt.s32.f32 %v1592
        %v1609 = vcvt.s32.f32 %v1593
        %v1610 = vcvt.s32.f32 %v1594
        %v1611 = vcvt.s32.f32 %v1595
        %v1612 = vcvt.s32.f32 %v1596
        %v1613 = vcvt.s32.f32 %v1597
        %v1614 = vcvt.s32.f32 %v1598
        %v1615 = vcvt.s32.f32 %v1599
        %v1616 = vcvt.s32.f32 %v1600
        %v1617 = vcvt.s32.f32 %v1601
        %v1618 = vcvt.s32.f32 %v1602
        %v1619 = vpack.c.bf16 %v1604, %v1603
        %v1620 = vpack.c.bf16 %v1606, %v1605
        %v1621 = vpack.c.bf16 %v1608, %v1607
        %v1622 = vpack.c.bf16 %v1610, %v1609
        %v1623 = vpack.c.bf16 %v1612, %v1611
        %v1624 = vpack.c.bf16 %v1614, %v1613
        %v1625 = vpack.c.bf16 %v1616, %v1615
        %v1626 = vpack.c.bf16 %v1618, %v1617
        %v1627 = vadd.bf16 %v1515, %v1619
        %v1628 = vadd.bf16 %v1516, %v1620
        %v1629 = vadd.bf16 %v1517, %v1621
        %v1630 = vadd.bf16 %v1518, %v1622
        %v1631 = vadd.bf16 %v1519, %v1623
        %v1632 = vadd.bf16 %v1520, %v1624
        %v1633 = vadd.bf16 %v1521, %v1625
        %v1634 = vadd.bf16 %v1522, %v1626
        %1635 = vset.pattern.permute.xlu0 12
        %1636 = vperm.xlu0 %1635, %v273
        %v1637 = vpop.permute.xlu0 %1636
        %1638 = vset.pattern.permute.xlu0 12
        %1639 = vperm.xlu0 %1638, %v274
        %v1640 = vpop.permute.xlu0 %1639
        %1641 = vset.pattern.permute.xlu0 12
        %1642 = vperm.xlu0 %1641, %v275
        %v1643 = vpop.permute.xlu0 %1642
        %1644 = vset.pattern.permute.xlu0 12
        %1645 = vperm.xlu0 %1644, %v276
        %v1646 = vpop.permute.xlu0 %1645
        %1647 = vset.pattern.permute.xlu0 12
        %1648 = vperm.xlu0 %1647, %v277
        %v1649 = vpop.permute.xlu0 %1648
        %1650 = vset.pattern.permute.xlu0 12
        %1651 = vperm.xlu0 %1650, %v278
        %v1652 = vpop.permute.xlu0 %1651
        %1653 = vset.pattern.permute.xlu0 12
        %1654 = vperm.xlu0 %1653, %v279
        %v1655 = vpop.permute.xlu0 %1654
        %1656 = vset.pattern.permute.xlu0 12
        %1657 = vperm.xlu0 %1656, %v280
        %v1658 = vpop.permute.xlu0 %1657
        %1659 = vset.pattern.permute.xlu0 12
        %1660 = vperm.xlu0 %1659, %v281
        %v1661 = vpop.permute.xlu0 %1660
        %1662 = vset.pattern.permute.xlu0 12
        %1663 = vperm.xlu0 %1662, %v282
        %v1664 = vpop.permute.xlu0 %1663
        %1665 = vset.pattern.permute.xlu0 12
        %1666 = vperm.xlu0 %1665, %v283
        %v1667 = vpop.permute.xlu0 %1666
        %1668 = vset.pattern.permute.xlu0 12
        %1669 = vperm.xlu0 %1668, %v284
        %v1670 = vpop.permute.xlu0 %1669
        %1671 = vset.pattern.permute.xlu0 12
        %1672 = vperm.xlu0 %1671, %v285
        %v1673 = vpop.permute.xlu0 %1672
        %1674 = vset.pattern.permute.xlu0 12
        %1675 = vperm.xlu0 %1674, %v286
        %v1676 = vpop.permute.xlu0 %1675
        %1677 = vset.pattern.permute.xlu0 12
        %1678 = vperm.xlu0 %1677, %v287
        %v1679 = vpop.permute.xlu0 %1678
        %1680 = vset.pattern.permute.xlu0 12
        %1681 = vperm.xlu0 %1680, %v288
        %v1682 = vpop.permute.xlu0 %1681
        %vm1683 = vcmp.eq.s32.totalorder %v1637, %v290
        %vm1684 = vcmp.eq.s32.totalorder %v1640, %v290
        %vm1685 = vcmp.eq.s32.totalorder %v1643, %v290
        %vm1686 = vcmp.eq.s32.totalorder %v1646, %v290
        %vm1687 = vcmp.eq.s32.totalorder %v1649, %v290
        %vm1688 = vcmp.eq.s32.totalorder %v1652, %v290
        %vm1689 = vcmp.eq.s32.totalorder %v1655, %v290
        %vm1690 = vcmp.eq.s32.totalorder %v1658, %v290
        %vm1691 = vcmp.eq.s32.totalorder %v1661, %v290
        %vm1692 = vcmp.eq.s32.totalorder %v1664, %v290
        %vm1693 = vcmp.eq.s32.totalorder %v1667, %v290
        %vm1694 = vcmp.eq.s32.totalorder %v1670, %v290
        %vm1695 = vcmp.eq.s32.totalorder %v1673, %v290
        %vm1696 = vcmp.eq.s32.totalorder %v1676, %v290
        %vm1697 = vcmp.eq.s32.totalorder %v1679, %v290
        %vm1698 = vcmp.eq.s32.totalorder %v1682, %v290
        %v1699 = vsel %vm1683, 1, 0
        %v1700 = vsel %vm1684, 1, 0
        %v1701 = vsel %vm1685, 1, 0
        %v1702 = vsel %vm1686, 1, 0
        %v1703 = vsel %vm1687, 1, 0
        %v1704 = vsel %vm1688, 1, 0
        %v1705 = vsel %vm1689, 1, 0
        %v1706 = vsel %vm1690, 1, 0
        %v1707 = vsel %vm1691, 1, 0
        %v1708 = vsel %vm1692, 1, 0
        %v1709 = vsel %vm1693, 1, 0
        %v1710 = vsel %vm1694, 1, 0
        %v1711 = vsel %vm1695, 1, 0
        %v1712 = vsel %vm1696, 1, 0
        %v1713 = vsel %vm1697, 1, 0
        %v1714 = vsel %vm1698, 1, 0
        %v1715 = vcvt.s32.f32 %v1699
        %v1716 = vcvt.s32.f32 %v1700
        %v1717 = vcvt.s32.f32 %v1701
        %v1718 = vcvt.s32.f32 %v1702
        %v1719 = vcvt.s32.f32 %v1703
        %v1720 = vcvt.s32.f32 %v1704
        %v1721 = vcvt.s32.f32 %v1705
        %v1722 = vcvt.s32.f32 %v1706
        %v1723 = vcvt.s32.f32 %v1707
        %v1724 = vcvt.s32.f32 %v1708
        %v1725 = vcvt.s32.f32 %v1709
        %v1726 = vcvt.s32.f32 %v1710
        %v1727 = vcvt.s32.f32 %v1711
        %v1728 = vcvt.s32.f32 %v1712
        %v1729 = vcvt.s32.f32 %v1713
        %v1730 = vcvt.s32.f32 %v1714
        %v1731 = vpack.c.bf16 %v1716, %v1715
        %v1732 = vpack.c.bf16 %v1718, %v1717
        %v1733 = vpack.c.bf16 %v1720, %v1719
        %v1734 = vpack.c.bf16 %v1722, %v1721
        %v1735 = vpack.c.bf16 %v1724, %v1723
        %v1736 = vpack.c.bf16 %v1726, %v1725
        %v1737 = vpack.c.bf16 %v1728, %v1727
        %v1738 = vpack.c.bf16 %v1730, %v1729
        %v1739 = vadd.bf16 %v1627, %v1731
        %v1740 = vadd.bf16 %v1628, %v1732
        %v1741 = vadd.bf16 %v1629, %v1733
        %v1742 = vadd.bf16 %v1630, %v1734
        %v1743 = vadd.bf16 %v1631, %v1735
        %v1744 = vadd.bf16 %v1632, %v1736
        %v1745 = vadd.bf16 %v1633, %v1737
        %v1746 = vadd.bf16 %v1634, %v1738
        %1747 = vset.pattern.permute.xlu0 13
        %1748 = vperm.xlu0 %1747, %v273
        %v1749 = vpop.permute.xlu0 %1748
        %1750 = vset.pattern.permute.xlu0 13
        %1751 = vperm.xlu0 %1750, %v274
        %v1752 = vpop.permute.xlu0 %1751
        %1753 = vset.pattern.permute.xlu0 13
        %1754 = vperm.xlu0 %1753, %v275
        %v1755 = vpop.permute.xlu0 %1754
        %1756 = vset.pattern.permute.xlu0 13
        %1757 = vperm.xlu0 %1756, %v276
        %v1758 = vpop.permute.xlu0 %1757
        %1759 = vset.pattern.permute.xlu0 13
        %1760 = vperm.xlu0 %1759, %v277
        %v1761 = vpop.permute.xlu0 %1760
        %1762 = vset.pattern.permute.xlu0 13
        %1763 = vperm.xlu0 %1762, %v278
        %v1764 = vpop.permute.xlu0 %1763
        %1765 = vset.pattern.permute.xlu0 13
        %1766 = vperm.xlu0 %1765, %v279
        %v1767 = vpop.permute.xlu0 %1766
        %1768 = vset.pattern.permute.xlu0 13
        %1769 = vperm.xlu0 %1768, %v280
        %v1770 = vpop.permute.xlu0 %1769
        %1771 = vset.pattern.permute.xlu0 13
        %1772 = vperm.xlu0 %1771, %v281
        %v1773 = vpop.permute.xlu0 %1772
        %1774 = vset.pattern.permute.xlu0 13
        %1775 = vperm.xlu0 %1774, %v282
        %v1776 = vpop.permute.xlu0 %1775
        %1777 = vset.pattern.permute.xlu0 13
        %1778 = vperm.xlu0 %1777, %v283
        %v1779 = vpop.permute.xlu0 %1778
        %1780 = vset.pattern.permute.xlu0 13
        %1781 = vperm.xlu0 %1780, %v284
        %v1782 = vpop.permute.xlu0 %1781
        %1783 = vset.pattern.permute.xlu0 13
        %1784 = vperm.xlu0 %1783, %v285
        %v1785 = vpop.permute.xlu0 %1784
        %1786 = vset.pattern.permute.xlu0 13
        %1787 = vperm.xlu0 %1786, %v286
        %v1788 = vpop.permute.xlu0 %1787
        %1789 = vset.pattern.permute.xlu0 13
        %1790 = vperm.xlu0 %1789, %v287
        %v1791 = vpop.permute.xlu0 %1790
        %1792 = vset.pattern.permute.xlu0 13
        %1793 = vperm.xlu0 %1792, %v288
        %v1794 = vpop.permute.xlu0 %1793
        %vm1795 = vcmp.eq.s32.totalorder %v1749, %v290
        %vm1796 = vcmp.eq.s32.totalorder %v1752, %v290
        %vm1797 = vcmp.eq.s32.totalorder %v1755, %v290
        %vm1798 = vcmp.eq.s32.totalorder %v1758, %v290
        %vm1799 = vcmp.eq.s32.totalorder %v1761, %v290
        %vm1800 = vcmp.eq.s32.totalorder %v1764, %v290
        %vm1801 = vcmp.eq.s32.totalorder %v1767, %v290
        %vm1802 = vcmp.eq.s32.totalorder %v1770, %v290
        %vm1803 = vcmp.eq.s32.totalorder %v1773, %v290
        %vm1804 = vcmp.eq.s32.totalorder %v1776, %v290
        %vm1805 = vcmp.eq.s32.totalorder %v1779, %v290
        %vm1806 = vcmp.eq.s32.totalorder %v1782, %v290
        %vm1807 = vcmp.eq.s32.totalorder %v1785, %v290
        %vm1808 = vcmp.eq.s32.totalorder %v1788, %v290
        %vm1809 = vcmp.eq.s32.totalorder %v1791, %v290
        %vm1810 = vcmp.eq.s32.totalorder %v1794, %v290
        %v1811 = vsel %vm1795, 1, 0
        %v1812 = vsel %vm1796, 1, 0
        %v1813 = vsel %vm1797, 1, 0
        %v1814 = vsel %vm1798, 1, 0
        %v1815 = vsel %vm1799, 1, 0
        %v1816 = vsel %vm1800, 1, 0
        %v1817 = vsel %vm1801, 1, 0
        %v1818 = vsel %vm1802, 1, 0
        %v1819 = vsel %vm1803, 1, 0
        %v1820 = vsel %vm1804, 1, 0
        %v1821 = vsel %vm1805, 1, 0
        %v1822 = vsel %vm1806, 1, 0
        %v1823 = vsel %vm1807, 1, 0
        %v1824 = vsel %vm1808, 1, 0
        %v1825 = vsel %vm1809, 1, 0
        %v1826 = vsel %vm1810, 1, 0
        %v1827 = vcvt.s32.f32 %v1811
        %v1828 = vcvt.s32.f32 %v1812
        %v1829 = vcvt.s32.f32 %v1813
        %v1830 = vcvt.s32.f32 %v1814
        %v1831 = vcvt.s32.f32 %v1815
        %v1832 = vcvt.s32.f32 %v1816
        %v1833 = vcvt.s32.f32 %v1817
        %v1834 = vcvt.s32.f32 %v1818
        %v1835 = vcvt.s32.f32 %v1819
        %v1836 = vcvt.s32.f32 %v1820
        %v1837 = vcvt.s32.f32 %v1821
        %v1838 = vcvt.s32.f32 %v1822
        %v1839 = vcvt.s32.f32 %v1823
        %v1840 = vcvt.s32.f32 %v1824
        %v1841 = vcvt.s32.f32 %v1825
        %v1842 = vcvt.s32.f32 %v1826
        %v1843 = vpack.c.bf16 %v1828, %v1827
        %v1844 = vpack.c.bf16 %v1830, %v1829
        %v1845 = vpack.c.bf16 %v1832, %v1831
        %v1846 = vpack.c.bf16 %v1834, %v1833
        %v1847 = vpack.c.bf16 %v1836, %v1835
        %v1848 = vpack.c.bf16 %v1838, %v1837
        %v1849 = vpack.c.bf16 %v1840, %v1839
        %v1850 = vpack.c.bf16 %v1842, %v1841
        %v1851 = vadd.bf16 %v1739, %v1843
        %v1852 = vadd.bf16 %v1740, %v1844
        %v1853 = vadd.bf16 %v1741, %v1845
        %v1854 = vadd.bf16 %v1742, %v1846
        %v1855 = vadd.bf16 %v1743, %v1847
        %v1856 = vadd.bf16 %v1744, %v1848
        %v1857 = vadd.bf16 %v1745, %v1849
        %v1858 = vadd.bf16 %v1746, %v1850
        %1859 = vset.pattern.permute.xlu0 14
        %1860 = vperm.xlu0 %1859, %v273
        %v1861 = vpop.permute.xlu0 %1860
        %1862 = vset.pattern.permute.xlu0 14
        %1863 = vperm.xlu0 %1862, %v274
        %v1864 = vpop.permute.xlu0 %1863
        %1865 = vset.pattern.permute.xlu0 14
        %1866 = vperm.xlu0 %1865, %v275
        %v1867 = vpop.permute.xlu0 %1866
        %1868 = vset.pattern.permute.xlu0 14
        %1869 = vperm.xlu0 %1868, %v276
        %v1870 = vpop.permute.xlu0 %1869
        %1871 = vset.pattern.permute.xlu0 14
        %1872 = vperm.xlu0 %1871, %v277
        %v1873 = vpop.permute.xlu0 %1872
        %1874 = vset.pattern.permute.xlu0 14
        %1875 = vperm.xlu0 %1874, %v278
        %v1876 = vpop.permute.xlu0 %1875
        %1877 = vset.pattern.permute.xlu0 14
        %1878 = vperm.xlu0 %1877, %v279
        %v1879 = vpop.permute.xlu0 %1878
        %1880 = vset.pattern.permute.xlu0 14
        %1881 = vperm.xlu0 %1880, %v280
        %v1882 = vpop.permute.xlu0 %1881
        %1883 = vset.pattern.permute.xlu0 14
        %1884 = vperm.xlu0 %1883, %v281
        %v1885 = vpop.permute.xlu0 %1884
        %1886 = vset.pattern.permute.xlu0 14
        %1887 = vperm.xlu0 %1886, %v282
        %v1888 = vpop.permute.xlu0 %1887
        %1889 = vset.pattern.permute.xlu0 14
        %1890 = vperm.xlu0 %1889, %v283
        %v1891 = vpop.permute.xlu0 %1890
        %1892 = vset.pattern.permute.xlu0 14
        %1893 = vperm.xlu0 %1892, %v284
        %v1894 = vpop.permute.xlu0 %1893
        %1895 = vset.pattern.permute.xlu0 14
        %1896 = vperm.xlu0 %1895, %v285
        %v1897 = vpop.permute.xlu0 %1896
        %1898 = vset.pattern.permute.xlu0 14
        %1899 = vperm.xlu0 %1898, %v286
        %v1900 = vpop.permute.xlu0 %1899
        %1901 = vset.pattern.permute.xlu0 14
        %1902 = vperm.xlu0 %1901, %v287
        %v1903 = vpop.permute.xlu0 %1902
        %1904 = vset.pattern.permute.xlu0 14
        %1905 = vperm.xlu0 %1904, %v288
        %v1906 = vpop.permute.xlu0 %1905
        %vm1907 = vcmp.eq.s32.totalorder %v1861, %v290
        %vm1908 = vcmp.eq.s32.totalorder %v1864, %v290
        %vm1909 = vcmp.eq.s32.totalorder %v1867, %v290
        %vm1910 = vcmp.eq.s32.totalorder %v1870, %v290
        %vm1911 = vcmp.eq.s32.totalorder %v1873, %v290
        %vm1912 = vcmp.eq.s32.totalorder %v1876, %v290
        %vm1913 = vcmp.eq.s32.totalorder %v1879, %v290
        %vm1914 = vcmp.eq.s32.totalorder %v1882, %v290
        %vm1915 = vcmp.eq.s32.totalorder %v1885, %v290
        %vm1916 = vcmp.eq.s32.totalorder %v1888, %v290
        %vm1917 = vcmp.eq.s32.totalorder %v1891, %v290
        %vm1918 = vcmp.eq.s32.totalorder %v1894, %v290
        %vm1919 = vcmp.eq.s32.totalorder %v1897, %v290
        %vm1920 = vcmp.eq.s32.totalorder %v1900, %v290
        %vm1921 = vcmp.eq.s32.totalorder %v1903, %v290
        %vm1922 = vcmp.eq.s32.totalorder %v1906, %v290
        %v1923 = vsel %vm1907, 1, 0
        %v1924 = vsel %vm1908, 1, 0
        %v1925 = vsel %vm1909, 1, 0
        %v1926 = vsel %vm1910, 1, 0
        %v1927 = vsel %vm1911, 1, 0
        %v1928 = vsel %vm1912, 1, 0
        %v1929 = vsel %vm1913, 1, 0
        %v1930 = vsel %vm1914, 1, 0
        %v1931 = vsel %vm1915, 1, 0
        %v1932 = vsel %vm1916, 1, 0
        %v1933 = vsel %vm1917, 1, 0
        %v1934 = vsel %vm1918, 1, 0
        %v1935 = vsel %vm1919, 1, 0
        %v1936 = vsel %vm1920, 1, 0
        %v1937 = vsel %vm1921, 1, 0
        %v1938 = vsel %vm1922, 1, 0
        %v1939 = vcvt.s32.f32 %v1923
        %v1940 = vcvt.s32.f32 %v1924
        %v1941 = vcvt.s32.f32 %v1925
        %v1942 = vcvt.s32.f32 %v1926
        %v1943 = vcvt.s32.f32 %v1927
        %v1944 = vcvt.s32.f32 %v1928
        %v1945 = vcvt.s32.f32 %v1929
        %v1946 = vcvt.s32.f32 %v1930
        %v1947 = vcvt.s32.f32 %v1931
        %v1948 = vcvt.s32.f32 %v1932
        %v1949 = vcvt.s32.f32 %v1933
        %v1950 = vcvt.s32.f32 %v1934
        %v1951 = vcvt.s32.f32 %v1935
        %v1952 = vcvt.s32.f32 %v1936
        %v1953 = vcvt.s32.f32 %v1937
        %v1954 = vcvt.s32.f32 %v1938
        %v1955 = vpack.c.bf16 %v1940, %v1939
        %v1956 = vpack.c.bf16 %v1942, %v1941
        %v1957 = vpack.c.bf16 %v1944, %v1943
        %v1958 = vpack.c.bf16 %v1946, %v1945
        %v1959 = vpack.c.bf16 %v1948, %v1947
        %v1960 = vpack.c.bf16 %v1950, %v1949
        %v1961 = vpack.c.bf16 %v1952, %v1951
        %v1962 = vpack.c.bf16 %v1954, %v1953
        %v1963 = vadd.bf16 %v1851, %v1955
        %v1964 = vadd.bf16 %v1852, %v1956
        %v1965 = vadd.bf16 %v1853, %v1957
        %v1966 = vadd.bf16 %v1854, %v1958
        %v1967 = vadd.bf16 %v1855, %v1959
        %v1968 = vadd.bf16 %v1856, %v1960
        %v1969 = vadd.bf16 %v1857, %v1961
        %v1970 = vadd.bf16 %v1858, %v1962
        %1971 = vset.pattern.permute.xlu0 15
        %1972 = vperm.xlu0 %1971, %v273
        %v1973 = vpop.permute.xlu0 %1972
        %1974 = vset.pattern.permute.xlu0 15
        %1975 = vperm.xlu0 %1974, %v274
        %v1976 = vpop.permute.xlu0 %1975
        %1977 = vset.pattern.permute.xlu0 15
        %1978 = vperm.xlu0 %1977, %v275
        %v1979 = vpop.permute.xlu0 %1978
        %1980 = vset.pattern.permute.xlu0 15
        %1981 = vperm.xlu0 %1980, %v276
        %v1982 = vpop.permute.xlu0 %1981
        %1983 = vset.pattern.permute.xlu0 15
        %1984 = vperm.xlu0 %1983, %v277
        %v1985 = vpop.permute.xlu0 %1984
        %1986 = vset.pattern.permute.xlu0 15
        %1987 = vperm.xlu0 %1986, %v278
        %v1988 = vpop.permute.xlu0 %1987
        %1989 = vset.pattern.permute.xlu0 15
        %1990 = vperm.xlu0 %1989, %v279
        %v1991 = vpop.permute.xlu0 %1990
        %1992 = vset.pattern.permute.xlu0 15
        %1993 = vperm.xlu0 %1992, %v280
        %v1994 = vpop.permute.xlu0 %1993
        %1995 = vset.pattern.permute.xlu0 15
        %1996 = vperm.xlu0 %1995, %v281
        %v1997 = vpop.permute.xlu0 %1996
        %1998 = vset.pattern.permute.xlu0 15
        %1999 = vperm.xlu0 %1998, %v282
        %v2000 = vpop.permute.xlu0 %1999
        %2001 = vset.pattern.permute.xlu0 15
        %2002 = vperm.xlu0 %2001, %v283
        %v2003 = vpop.permute.xlu0 %2002
        %2004 = vset.pattern.permute.xlu0 15
        %2005 = vperm.xlu0 %2004, %v284
        %v2006 = vpop.permute.xlu0 %2005
        %2007 = vset.pattern.permute.xlu0 15
        %2008 = vperm.xlu0 %2007, %v285
        %v2009 = vpop.permute.xlu0 %2008
        %2010 = vset.pattern.permute.xlu0 15
        %2011 = vperm.xlu0 %2010, %v286
        %v2012 = vpop.permute.xlu0 %2011
        %2013 = vset.pattern.permute.xlu0 15
        %2014 = vperm.xlu0 %2013, %v287
        %v2015 = vpop.permute.xlu0 %2014
        %2016 = vset.pattern.permute.xlu0 15
        %2017 = vperm.xlu0 %2016, %v288
        %v2018 = vpop.permute.xlu0 %2017
        %vm2019 = vcmp.eq.s32.totalorder %v1973, %v290
        %vm2020 = vcmp.eq.s32.totalorder %v1976, %v290
        %vm2021 = vcmp.eq.s32.totalorder %v1979, %v290
        %vm2022 = vcmp.eq.s32.totalorder %v1982, %v290
        %vm2023 = vcmp.eq.s32.totalorder %v1985, %v290
        %vm2024 = vcmp.eq.s32.totalorder %v1988, %v290
        %vm2025 = vcmp.eq.s32.totalorder %v1991, %v290
        %vm2026 = vcmp.eq.s32.totalorder %v1994, %v290
        %vm2027 = vcmp.eq.s32.totalorder %v1997, %v290
        %vm2028 = vcmp.eq.s32.totalorder %v2000, %v290
        %vm2029 = vcmp.eq.s32.totalorder %v2003, %v290
        %vm2030 = vcmp.eq.s32.totalorder %v2006, %v290
        %vm2031 = vcmp.eq.s32.totalorder %v2009, %v290
        %vm2032 = vcmp.eq.s32.totalorder %v2012, %v290
        %vm2033 = vcmp.eq.s32.totalorder %v2015, %v290
        %vm2034 = vcmp.eq.s32.totalorder %v2018, %v290
        %v2035 = vsel %vm2019, 1, 0
        %v2036 = vsel %vm2020, 1, 0
        %v2037 = vsel %vm2021, 1, 0
        %v2038 = vsel %vm2022, 1, 0
        %v2039 = vsel %vm2023, 1, 0
        %v2040 = vsel %vm2024, 1, 0
        %v2041 = vsel %vm2025, 1, 0
        %v2042 = vsel %vm2026, 1, 0
        %v2043 = vsel %vm2027, 1, 0
        %v2044 = vsel %vm2028, 1, 0
        %v2045 = vsel %vm2029, 1, 0
        %v2046 = vsel %vm2030, 1, 0
        %v2047 = vsel %vm2031, 1, 0
        %v2048 = vsel %vm2032, 1, 0
        %v2049 = vsel %vm2033, 1, 0
        %v2050 = vsel %vm2034, 1, 0
        %v2051 = vcvt.s32.f32 %v2035
        %v2052 = vcvt.s32.f32 %v2036
        %v2053 = vcvt.s32.f32 %v2037
        %v2054 = vcvt.s32.f32 %v2038
        %v2055 = vcvt.s32.f32 %v2039
        %v2056 = vcvt.s32.f32 %v2040
        %v2057 = vcvt.s32.f32 %v2041
        %v2058 = vcvt.s32.f32 %v2042
        %v2059 = vcvt.s32.f32 %v2043
        %v2060 = vcvt.s32.f32 %v2044
        %v2061 = vcvt.s32.f32 %v2045
        %v2062 = vcvt.s32.f32 %v2046
        %v2063 = vcvt.s32.f32 %v2047
        %v2064 = vcvt.s32.f32 %v2048
        %v2065 = vcvt.s32.f32 %v2049
        %v2066 = vcvt.s32.f32 %v2050
        %v2067 = vpack.c.bf16 %v2052, %v2051
        %v2068 = vpack.c.bf16 %v2054, %v2053
        %v2069 = vpack.c.bf16 %v2056, %v2055
        %v2070 = vpack.c.bf16 %v2058, %v2057
        %v2071 = vpack.c.bf16 %v2060, %v2059
        %v2072 = vpack.c.bf16 %v2062, %v2061
        %v2073 = vpack.c.bf16 %v2064, %v2063
        %v2074 = vpack.c.bf16 %v2066, %v2065
        %v2075 = vadd.bf16 %v1963, %v2067
        %v2076 = vadd.bf16 %v1964, %v2068
        %v2077 = vadd.bf16 %v1965, %v2069
        %v2078 = vadd.bf16 %v1966, %v2070
        %v2079 = vadd.bf16 %v1967, %v2071
        %v2080 = vadd.bf16 %v1968, %v2072
        %v2081 = vadd.bf16 %v1969, %v2073
        %v2082 = vadd.bf16 %v1970, %v2074
        %v2083 = vld [vmem:[#allocation2] sm:$0xff]
        %v2084 = vld [vmem:[#allocation2 + $0x8] sm:$0xff]
        %v2085 = vld [vmem:[#allocation2 + $0x10] sm:$0xff]
        %v2086 = vld [vmem:[#allocation2 + $0x18] sm:$0xff]
        %v2087 = vld [vmem:[#allocation2 + $0x20] sm:$0xff]
        %v2088 = vld [vmem:[#allocation2 + $0x28] sm:$0xff]
        %v2089 = vld [vmem:[#allocation2 + $0x30] sm:$0xff]
        %v2090 = vld [vmem:[#allocation2 + $0x38] sm:$0xff]
        %v2091 = vld [vmem:[#allocation2 + $0x40] sm:$0xff]
        %v2092 = vld [vmem:[#allocation2 + $0x48] sm:$0xff]
        %v2093 = vld [vmem:[#allocation2 + $0x50] sm:$0xff]
        %v2094 = vld [vmem:[#allocation2 + $0x58] sm:$0xff]
        %v2095 = vld [vmem:[#allocation2 + $0x60] sm:$0xff]
        %v2096 = vld [vmem:[#allocation2 + $0x68] sm:$0xff]
        %v2097 = vld [vmem:[#allocation2 + $0x70] sm:$0xff]
        %v2098 = vld [vmem:[#allocation2 + $0x78] sm:$0xff]
        %v2099 = vld [vmem:[%s230] sm:$0xf]
        %v2100 = vld [vmem:[%s230 + $0x4] sm:$0xf]
        %v2101 = vld [vmem:[%s230 + $0x8] sm:$0xf]
        %v2102 = vld [vmem:[%s230 + $0xc] sm:$0xf]
        %v2103 = vld [vmem:[%s230 + $0x10] sm:$0xf]
        %v2104 = vld [vmem:[%s230 + $0x14] sm:$0xf]
        %v2105 = vld [vmem:[%s230 + $0x18] sm:$0xf]
        %v2106 = vld [vmem:[%s230 + $0x1c] sm:$0xf]
        %v2107 = vld [vmem:[%s230 + $0x20] sm:$0xf]
        %v2108 = vld [vmem:[%s230 + $0x24] sm:$0xf]
        %v2109 = vld [vmem:[%s230 + $0x28] sm:$0xf]
        %v2110 = vld [vmem:[%s230 + $0x2c] sm:$0xf]
        %v2111 = vld [vmem:[%s230 + $0x30] sm:$0xf]
        %v2112 = vld [vmem:[%s230 + $0x34] sm:$0xf]
        %v2113 = vld [vmem:[%s230 + $0x38] sm:$0xf]
        %v2114 = vld [vmem:[%s230 + $0x3c] sm:$0xf]
        %v2131 = vunpack.c.l.b16 %v2099
        %v2132 = vunpack.c.l.b16 %v2100
        %v2133 = vunpack.c.l.b16 %v2101
        %v2134 = vunpack.c.l.b16 %v2102
        %v2135 = vunpack.c.l.b16 %v2103
        %v2136 = vunpack.c.l.b16 %v2104
        %v2137 = vunpack.c.l.b16 %v2105
        %v2138 = vunpack.c.l.b16 %v2106
        %v2139 = vunpack.c.l.b16 %v2107
        %v2140 = vunpack.c.l.b16 %v2108
        %v2141 = vunpack.c.l.b16 %v2109
        %v2142 = vunpack.c.l.b16 %v2110
        %v2143 = vunpack.c.l.b16 %v2111
        %v2144 = vunpack.c.l.b16 %v2112
        %v2145 = vunpack.c.l.b16 %v2113
        %v2146 = vunpack.c.l.b16 %v2114
        %v2147 = vpack.c.b16 %v2132, %v2131
        %v2148 = vpack.c.b16 %v2134, %v2133
        %v2149 = vpack.c.b16 %v2136, %v2135
        %v2150 = vpack.c.b16 %v2138, %v2137
        %v2151 = vpack.c.b16 %v2140, %v2139
        %v2152 = vpack.c.b16 %v2142, %v2141
        %v2153 = vpack.c.b16 %v2144, %v2143
        %v2154 = vpack.c.b16 %v2146, %v2145
        %2163 = vmatprep.subr.bf16.mxu0 0
        %2164 = vmatpush1.bf16.msra.mxu0 %v2154
        %2165 = vmatprep.subr.bf16.mxu0 0
        %2166 = vmatpush1.bf16.msra.mxu0 %v2153
        %2167 = vmatprep.subr.bf16.mxu0 0
        %2168 = vmatpush1.bf16.msra.mxu0 %v2152
        %2169 = vmatprep.subr.bf16.mxu0 0
        %2170 = vmatpush1.bf16.msra.mxu0 %v2151
        %2171 = vmatprep.subr.bf16.mxu0 0
        %2172 = vmatpush1.bf16.msra.mxu0 %v2150
        %2173 = vmatprep.subr.bf16.mxu0 0
        %2174 = vmatpush1.bf16.msra.mxu0 %v2149
        %2175 = vmatprep.subr.bf16.mxu0 0
        %2176 = vmatpush1.bf16.msra.mxu0 %v2148
        %2177 = vmatprep.subr.bf16.mxu0 0
        %2178 = vmatpush1.bf16.msra.mxu0 %v2147
        %2179 = vmatprep.subr.bf16.mxu0 0
        %2180 = vmatpush2.bf16.msra.mxu0 0
        %2181 = vmatprep.subr.bf16.mxu0 0
        %2182 = vmatpush2.bf16.msra.mxu0 0
        %2183 = vmatprep.subr.bf16.mxu0 0
        %2184 = vmatpush2.bf16.msra.mxu0 0
        %2185 = vmatprep.subr.bf16.mxu0 0
        %2186 = vmatpush2.bf16.msra.mxu0 0
        %2187 = vmatprep.subr.bf16.mxu0 0
        %2188 = vmatpush2.bf16.msra.mxu0 0
        %2189 = vmatprep.subr.bf16.mxu0 0
        %2190 = vmatpush2.bf16.msra.mxu0 0
        %2191 = vmatprep.subr.bf16.mxu0 0
        %2192 = vmatpush2.bf16.msra.mxu0 0
        %2193 = vmatprep.subr.bf16.mxu0 0
        %2194 = vmatpush2.bf16.msra.mxu0 0
        %2195 = vmatprep.mubr.bf16.mxu0 0
        %2196 = vmatmul.mubr.bf16.gmra.mxu0 %v2075
        %v2197 = vpop.f32.mrf.mxu0
        %v2198 = vadd.f32 0.0, %v2197
        %v2199 = vpop.f32.mrf.mxu0
        %v2200 = vpop.f32.mrf.mxu0
        %v2201 = vadd.f32 0.0, %v2200
        %v2202 = vpop.f32.mrf.mxu0
        %2203 = vmatprep.mubr.bf16.mxu0 0
        %2204 = vmatmul.mubr.bf16.gmra.mxu0 %v2076
        %v2205 = vpop.f32.mrf.mxu0
        %v2206 = vadd.f32 0.0, %v2205
        %v2207 = vpop.f32.mrf.mxu0
        %v2208 = vpop.f32.mrf.mxu0
        %v2209 = vadd.f32 0.0, %v2208
        %v2210 = vpop.f32.mrf.mxu0
        %2211 = vmatprep.mubr.bf16.mxu0 0
        %2212 = vmatmul.mubr.bf16.gmra.mxu0 %v2077
        %v2213 = vpop.f32.mrf.mxu0
        %v2214 = vadd.f32 0.0, %v2213
        %v2215 = vpop.f32.mrf.mxu0
        %v2216 = vpop.f32.mrf.mxu0
        %v2217 = vadd.f32 0.0, %v2216
        %v2218 = vpop.f32.mrf.mxu0
        %2219 = vmatprep.mubr.bf16.mxu0 0
        %2220 = vmatmul.mubr.bf16.gmra.mxu0 %v2078
        %v2221 = vpop.f32.mrf.mxu0
        %v2222 = vadd.f32 0.0, %v2221
        %v2223 = vpop.f32.mrf.mxu0
        %v2224 = vpop.f32.mrf.mxu0
        %v2225 = vadd.f32 0.0, %v2224
        %v2226 = vpop.f32.mrf.mxu0
        %2227 = vmatprep.mubr.bf16.mxu0 0
        %2228 = vmatmul.mubr.bf16.gmra.mxu0 %v2079
        %v2229 = vpop.f32.mrf.mxu0
        %v2230 = vadd.f32 0.0, %v2229
        %v2231 = vpop.f32.mrf.mxu0
        %v2232 = vpop.f32.mrf.mxu0
        %v2233 = vadd.f32 0.0, %v2232
        %v2234 = vpop.f32.mrf.mxu0
        %2235 = vmatprep.mubr.bf16.mxu0 0
        %2236 = vmatmul.mubr.bf16.gmra.mxu0 %v2080
        %v2237 = vpop.f32.mrf.mxu0
        %v2238 = vadd.f32 0.0, %v2237
        %v2239 = vpop.f32.mrf.mxu0
        %v2240 = vpop.f32.mrf.mxu0
        %v2241 = vadd.f32 0.0, %v2240
        %v2242 = vpop.f32.mrf.mxu0
        %2243 = vmatprep.mubr.bf16.mxu0 0
        %2244 = vmatmul.mubr.bf16.gmra.mxu0 %v2081
        %v2245 = vpop.f32.mrf.mxu0
        %v2246 = vadd.f32 0.0, %v2245
        %v2247 = vpop.f32.mrf.mxu0
        %v2248 = vpop.f32.mrf.mxu0
        %v2249 = vadd.f32 0.0, %v2248
        %v2250 = vpop.f32.mrf.mxu0
        %2251 = vmatprep.mubr.bf16.mxu0 0
        %2252 = vmatmul.mubr.bf16.gmra.mxu0 %v2082
        %v2253 = vpop.f32.mrf.mxu0
        %v2254 = vadd.f32 0.0, %v2253
        %v2255 = vpop.f32.mrf.mxu0
        %v2256 = vpop.f32.mrf.mxu0
        %v2257 = vadd.f32 0.0, %v2256
        %v2258 = vpop.f32.mrf.mxu0
        %2259 = vdwg.mxu0
        %v2260 = vadd.f32 %v2083, %v2198
        %v2261 = vadd.f32 %v2084, %v2201
        %v2262 = vadd.f32 %v2085, %v2206
        %v2263 = vadd.f32 %v2086, %v2209
        %v2264 = vadd.f32 %v2087, %v2214
        %v2265 = vadd.f32 %v2088, %v2217
        %v2266 = vadd.f32 %v2089, %v2222
        %v2267 = vadd.f32 %v2090, %v2225
        %v2268 = vadd.f32 %v2091, %v2230
        %v2269 = vadd.f32 %v2092, %v2233
        %v2270 = vadd.f32 %v2093, %v2238
        %v2271 = vadd.f32 %v2094, %v2241
        %v2272 = vadd.f32 %v2095, %v2246
        %v2273 = vadd.f32 %v2096, %v2249
        %v2274 = vadd.f32 %v2097, %v2254
        %v2275 = vadd.f32 %v2098, %v2257
        %vm2276 = vcmask 523264
        %2277 = vst.msk [vmem:[#allocation2] sm:$0xff] %vm2276, %v2260
        %2278 = vst.msk [vmem:[#allocation2 + $0x8] sm:$0xff] %vm2276, %v2261
        %2279 = vst.msk [vmem:[#allocation2 + $0x10] sm:$0xff] %vm2276, %v2262
        %2280 = vst.msk [vmem:[#allocation2 + $0x18] sm:$0xff] %vm2276, %v2263
        %2281 = vst.msk [vmem:[#allocation2 + $0x20] sm:$0xff] %vm2276, %v2264
        %2282 = vst.msk [vmem:[#allocation2 + $0x28] sm:$0xff] %vm2276, %v2265
        %2283 = vst.msk [vmem:[#allocation2 + $0x30] sm:$0xff] %vm2276, %v2266
        %2284 = vst.msk [vmem:[#allocation2 + $0x38] sm:$0xff] %vm2276, %v2267
        %2285 = vst.msk [vmem:[#allocation2 + $0x40] sm:$0xff] %vm2276, %v2268
        %2286 = vst.msk [vmem:[#allocation2 + $0x48] sm:$0xff] %vm2276, %v2269
        %2287 = vst.msk [vmem:[#allocation2 + $0x50] sm:$0xff] %vm2276, %v2270
        %2288 = vst.msk [vmem:[#allocation2 + $0x58] sm:$0xff] %vm2276, %v2271
        %2289 = vst.msk [vmem:[#allocation2 + $0x60] sm:$0xff] %vm2276, %v2272
        %2290 = vst.msk [vmem:[#allocation2 + $0x68] sm:$0xff] %vm2276, %v2273
        %2291 = vst.msk [vmem:[#allocation2 + $0x70] sm:$0xff] %vm2276, %v2274
        %2292 = vst.msk [vmem:[#allocation2 + $0x78] sm:$0xff] %vm2276, %v2275
        %p2293 = scmp.eq.s32.totalorder %s23, 3
        // Predicated region
        $region41: #{tpu_custom_call.1} parent=35 // pred_check
          %p2294 = pneg %p2293
        $region42: #{tpu_custom_call.1} parent=35 // pred_check_branch
          %2296 = sbr.rel (%p2294) target = $region44
        $region43: #{tpu_custom_call.1} parent=35 // pred_region
          %vm2297 = vcmp.ne.s32.totalorder %v255, 0
          %vm2298 = vcmp.ne.s32.totalorder %v256, 0
          %vm2299 = vcmp.ne.s32.totalorder %v257, 0
          %vm2300 = vcmp.ne.s32.totalorder %v258, 0
          %vm2301 = vcmp.ne.s32.totalorder %v259, 0
          %vm2302 = vcmp.ne.s32.totalorder %v260, 0
          %vm2303 = vcmp.ne.s32.totalorder %v261, 0
          %vm2304 = vcmp.ne.s32.totalorder %v262, 0
          %vm2305 = vcmp.ne.s32.totalorder %v263, 0
          %vm2306 = vcmp.ne.s32.totalorder %v264, 0
          %vm2307 = vcmp.ne.s32.totalorder %v265, 0
          %vm2308 = vcmp.ne.s32.totalorder %v266, 0
          %vm2309 = vcmp.ne.s32.totalorder %v267, 0
          %vm2310 = vcmp.ne.s32.totalorder %v268, 0
          %vm2311 = vcmp.ne.s32.totalorder %v269, 0
          %vm2312 = vcmp.ne.s32.totalorder %v270, 0
          %v2313 = vsel %vm2297, 1, 0
          %v2314 = vsel %vm2298, 1, 0
          %v2315 = vsel %vm2299, 1, 0
          %v2316 = vsel %vm2300, 1, 0
          %v2317 = vsel %vm2301, 1, 0
          %v2318 = vsel %vm2302, 1, 0
          %v2319 = vsel %vm2303, 1, 0
          %v2320 = vsel %vm2304, 1, 0
          %v2321 = vsel %vm2305, 1, 0
          %v2322 = vsel %vm2306, 1, 0
          %v2323 = vsel %vm2307, 1, 0
          %v2324 = vsel %vm2308, 1, 0
          %v2325 = vsel %vm2309, 1, 0
          %v2326 = vsel %vm2310, 1, 0
          %v2327 = vsel %vm2311, 1, 0
          %v2328 = vsel %vm2312, 1, 0
          %v2329 = vcvt.s32.f32 %v2313
          %v2330 = vcvt.s32.f32 %v2314
          %v2331 = vcvt.s32.f32 %v2315
          %v2332 = vcvt.s32.f32 %v2316
          %v2333 = vcvt.s32.f32 %v2317
          %v2334 = vcvt.s32.f32 %v2318
          %v2335 = vcvt.s32.f32 %v2319
          %v2336 = vcvt.s32.f32 %v2320
          %v2337 = vcvt.s32.f32 %v2321
          %v2338 = vcvt.s32.f32 %v2322
          %v2339 = vcvt.s32.f32 %v2323
          %v2340 = vcvt.s32.f32 %v2324
          %v2341 = vcvt.s32.f32 %v2325
          %v2342 = vcvt.s32.f32 %v2326
          %v2343 = vcvt.s32.f32 %v2327
          %v2344 = vcvt.s32.f32 %v2328
          %vm2345 = vcmask 130048
          %v2346 = vsel %vm2345, %v2329, 0.0
          %2347 = vadd.xlane.f32.xlu0 %v2346
          %v2348 = vpop.xlane.xlu0 %2347
          %v2349 = vsel %vm2345, %v2330, 0.0
          %2350 = vadd.xlane.f32.xlu0 %v2349
          %v2351 = vpop.xlane.xlu0 %2350
          %v2352 = vsel %vm2345, %v2331, 0.0
          %2353 = vadd.xlane.f32.xlu0 %v2352
          %v2354 = vpop.xlane.xlu0 %2353
          %v2355 = vsel %vm2345, %v2332, 0.0
          %2356 = vadd.xlane.f32.xlu0 %v2355
          %v2357 = vpop.xlane.xlu0 %2356
          %v2358 = vsel %vm2345, %v2333, 0.0
          %2359 = vadd.xlane.f32.xlu0 %v2358
          %v2360 = vpop.xlane.xlu0 %2359
          %v2361 = vsel %vm2345, %v2334, 0.0
          %2362 = vadd.xlane.f32.xlu0 %v2361
          %v2363 = vpop.xlane.xlu0 %2362
          %v2364 = vsel %vm2345, %v2335, 0.0
          %2365 = vadd.xlane.f32.xlu0 %v2364
          %v2366 = vpop.xlane.xlu0 %2365
          %v2367 = vsel %vm2345, %v2336, 0.0
          %2368 = vadd.xlane.f32.xlu0 %v2367
          %v2369 = vpop.xlane.xlu0 %2368
          %v2370 = vsel %vm2345, %v2337, 0.0
          %2371 = vadd.xlane.f32.xlu0 %v2370
          %v2372 = vpop.xlane.xlu0 %2371
          %v2373 = vsel %vm2345, %v2338, 0.0
          %2374 = vadd.xlane.f32.xlu0 %v2373
          %v2375 = vpop.xlane.xlu0 %2374
          %v2376 = vsel %vm2345, %v2339, 0.0
          %2377 = vadd.xlane.f32.xlu0 %v2376
          %v2378 = vpop.xlane.xlu0 %2377
          %v2379 = vsel %vm2345, %v2340, 0.0
          %2380 = vadd.xlane.f32.xlu0 %v2379
          %v2381 = vpop.xlane.xlu0 %2380
          %v2382 = vsel %vm2345, %v2341, 0.0
          %2383 = vadd.xlane.f32.xlu0 %v2382
          %v2384 = vpop.xlane.xlu0 %2383
          %v2385 = vsel %vm2345, %v2342, 0.0
          %2386 = vadd.xlane.f32.xlu0 %v2385
          %v2387 = vpop.xlane.xlu0 %2386
          %v2388 = vsel %vm2345, %v2343, 0.0
          %2389 = vadd.xlane.f32.xlu0 %v2388
          %v2390 = vpop.xlane.xlu0 %2389
          %v2391 = vsel %vm2345, %v2344, 0.0
          %2392 = vadd.xlane.f32.xlu0 %v2391
          %v2393 = vpop.xlane.xlu0 %2392
          %v2394 = vld [vmem:[#allocation2] sm:$0xff]
          %v2395 = vld [vmem:[#allocation2 + $0x8] sm:$0xff]
          %v2396 = vld [vmem:[#allocation2 + $0x10] sm:$0xff]
          %v2397 = vld [vmem:[#allocation2 + $0x18] sm:$0xff]
          %v2398 = vld [vmem:[#allocation2 + $0x20] sm:$0xff]
          %v2399 = vld [vmem:[#allocation2 + $0x28] sm:$0xff]
          %v2400 = vld [vmem:[#allocation2 + $0x30] sm:$0xff]
          %v2401 = vld [vmem:[#allocation2 + $0x38] sm:$0xff]
          %v2402 = vld [vmem:[#allocation2 + $0x40] sm:$0xff]
          %v2403 = vld [vmem:[#allocation2 + $0x48] sm:$0xff]
          %v2404 = vld [vmem:[#allocation2 + $0x50] sm:$0xff]
          %v2405 = vld [vmem:[#allocation2 + $0x58] sm:$0xff]
          %v2406 = vld [vmem:[#allocation2 + $0x60] sm:$0xff]
          %v2407 = vld [vmem:[#allocation2 + $0x68] sm:$0xff]
          %v2408 = vld [vmem:[#allocation2 + $0x70] sm:$0xff]
          %v2409 = vld [vmem:[#allocation2 + $0x78] sm:$0xff]
          %v2410 = vrcp.pop %v2348
          %v2411 = vmul.f32 %v2394, %v2410
          %v2412 = vrcp.pop %v2351
          %v2413 = vmul.f32 %v2395, %v2412
          %v2414 = vrcp.pop %v2354
          %v2415 = vmul.f32 %v2396, %v2414
          %v2416 = vrcp.pop %v2357
          %v2417 = vmul.f32 %v2397, %v2416
          %v2418 = vrcp.pop %v2360
          %v2419 = vmul.f32 %v2398, %v2418
          %v2420 = vrcp.pop %v2363
          %v2421 = vmul.f32 %v2399, %v2420
          %v2422 = vrcp.pop %v2366
          %v2423 = vmul.f32 %v2400, %v2422
          %v2424 = vrcp.pop %v2369
          %v2425 = vmul.f32 %v2401, %v2424
          %v2426 = vrcp.pop %v2372
          %v2427 = vmul.f32 %v2402, %v2426
          %v2428 = vrcp.pop %v2375
          %v2429 = vmul.f32 %v2403, %v2428
          %v2430 = vrcp.pop %v2378
          %v2431 = vmul.f32 %v2404, %v2430
          %v2432 = vrcp.pop %v2381
          %v2433 = vmul.f32 %v2405, %v2432
          %v2434 = vrcp.pop %v2384
          %v2435 = vmul.f32 %v2406, %v2434
          %v2436 = vrcp.pop %v2387
          %v2437 = vmul.f32 %v2407, %v2436
          %v2438 = vrcp.pop %v2390
          %v2439 = vmul.f32 %v2408, %v2438
          %v2440 = vrcp.pop %v2393
          %v2441 = vmul.f32 %v2409, %v2440
          %v2442 = vpack.c.bf16 %v2413, %v2411
          %v2443 = vpack.c.bf16 %v2417, %v2415
          %v2444 = vpack.c.bf16 %v2421, %v2419
          %v2445 = vpack.c.bf16 %v2425, %v2423
          %v2446 = vpack.c.bf16 %v2429, %v2427
          %v2447 = vpack.c.bf16 %v2433, %v2431
          %v2448 = vpack.c.bf16 %v2437, %v2435
          %v2449 = vpack.c.bf16 %v2441, %v2439
          %v2450 = vld [vmem:[%s2] sm:$0xf]
          %v2451 = vld [vmem:[%s2 + $0x4] sm:$0xf]
          %v2452 = vld [vmem:[%s2 + $0x8] sm:$0xf]
          %v2453 = vld [vmem:[%s2 + $0xc] sm:$0xf]
          %v2454 = vld [vmem:[%s2 + $0x10] sm:$0xf]
          %v2455 = vld [vmem:[%s2 + $0x14] sm:$0xf]
          %v2456 = vld [vmem:[%s2 + $0x18] sm:$0xf]
          %v2457 = vld [vmem:[%s2 + $0x1c] sm:$0xf]
          %v2458 = vld [vmem:[%s3] sm:$0x1]
          %v2460 = vlaneseq
          %v2461 = vshrl.u32 %v2460, 7
          %v2462 = vsub.s32 0, %v2461
          %v2463 = vrot.slane %v2458, %v2462
          %v2473 = vunpack.c.l.b16 %v2450
          %v2474 = vunpack.c.l.b16 %v2451
          %v2475 = vunpack.c.l.b16 %v2452
          %v2476 = vunpack.c.l.b16 %v2453
          %v2477 = vunpack.c.l.b16 %v2454
          %v2478 = vunpack.c.l.b16 %v2455
          %v2479 = vunpack.c.l.b16 %v2456
          %v2480 = vunpack.c.l.b16 %v2457
          %v2481 = vpack.c.b16 %v2474, %v2473
          %v2482 = vpack.c.b16 %v2476, %v2475
          %v2483 = vpack.c.b16 %v2478, %v2477
          %v2484 = vpack.c.b16 %v2480, %v2479
          %v2490 = vsel %vm2276, %v2442, 0
          %v2493 = vsel %vm2276, %v2443, 0
          %v2496 = vsel %vm2276, %v2444, 0
          %v2499 = vsel %vm2276, %v2445, 0
          %v2502 = vsel %vm2276, %v2446, 0
          %v2505 = vsel %vm2276, %v2447, 0
          %v2508 = vsel %vm2276, %v2448, 0
          %v2511 = vsel %vm2276, %v2449, 0
          %2513 = vmatprep.subr.bf16.mxu0 0
          %2514 = vmatpush1.bf16.msra.mxu0 0
          %2515 = vmatprep.subr.bf16.mxu0 0
          %2516 = vmatpush1.bf16.msra.mxu0 0
          %2517 = vmatprep.subr.bf16.mxu0 0
          %2518 = vmatpush1.bf16.msra.mxu0 0
          %2519 = vmatprep.subr.bf16.mxu0 0
          %2520 = vmatpush1.bf16.msra.mxu0 0
          %2521 = vmatprep.subr.bf16.mxu0 0
          %2522 = vmatpush1.bf16.msra.mxu0 %v2484
          %2523 = vmatprep.subr.bf16.mxu0 0
          %2524 = vmatpush1.bf16.msra.mxu0 %v2483
          %2525 = vmatprep.subr.bf16.mxu0 0
          %2526 = vmatpush1.bf16.msra.mxu0 %v2482
          %2527 = vmatprep.subr.bf16.mxu0 0
          %2528 = vmatpush1.bf16.msra.mxu0 %v2481
          %2529 = vmatprep.subr.bf16.mxu0 0
          %2530 = vmatpush2.bf16.msra.mxu0 0
          %2531 = vmatprep.subr.bf16.mxu0 0
          %2532 = vmatpush2.bf16.msra.mxu0 0
          %2533 = vmatprep.subr.bf16.mxu0 0
          %2534 = vmatpush2.bf16.msra.mxu0 0
          %2535 = vmatprep.subr.bf16.mxu0 0
          %2536 = vmatpush2.bf16.msra.mxu0 0
          %2537 = vmatprep.subr.bf16.mxu0 0
          %2538 = vmatpush2.bf16.msra.mxu0 0
          %2539 = vmatprep.subr.bf16.mxu0 0
          %2540 = vmatpush2.bf16.msra.mxu0 0
          %2541 = vmatprep.subr.bf16.mxu0 0
          %2542 = vmatpush2.bf16.msra.mxu0 0
          %2543 = vmatprep.subr.bf16.mxu0 0
          %2544 = vmatpush2.bf16.msra.mxu0 0
          %2545 = vmatprep.mubr.bf16.mxu0 0
          %2546 = vmatmul.mubr.bf16.gmra.mxu0 %v2490
          %v2547 = vpop.f32.mrf.mxu0
          %v2548 = vadd.f32 %v2463, %v2547
          %v2549 = vpop.f32.mrf.mxu0
          %v2550 = vpop.f32.mrf.mxu0
          %v2551 = vadd.f32 %v2463, %v2550
          %v2552 = vpop.f32.mrf.mxu0
          %2553 = vmatprep.mubr.bf16.mxu0 0
          %2554 = vmatmul.mubr.bf16.gmra.mxu0 %v2493
          %v2555 = vpop.f32.mrf.mxu0
          %v2556 = vadd.f32 %v2463, %v2555
          %v2557 = vpop.f32.mrf.mxu0
          %v2558 = vpop.f32.mrf.mxu0
          %v2559 = vadd.f32 %v2463, %v2558
          %v2560 = vpop.f32.mrf.mxu0
          %2561 = vmatprep.mubr.bf16.mxu0 0
          %2562 = vmatmul.mubr.bf16.gmra.mxu0 %v2496
          %v2563 = vpop.f32.mrf.mxu0
          %v2564 = vadd.f32 %v2463, %v2563
          %v2565 = vpop.f32.mrf.mxu0
          %v2566 = vpop.f32.mrf.mxu0
          %v2567 = vadd.f32 %v2463, %v2566
          %v2568 = vpop.f32.mrf.mxu0
          %2569 = vmatprep.mubr.bf16.mxu0 0
          %2570 = vmatmul.mubr.bf16.gmra.mxu0 %v2499
          %v2571 = vpop.f32.mrf.mxu0
          %v2572 = vadd.f32 %v2463, %v2571
          %v2573 = vpop.f32.mrf.mxu0
          %v2574 = vpop.f32.mrf.mxu0
          %v2575 = vadd.f32 %v2463, %v2574
          %v2576 = vpop.f32.mrf.mxu0
          %2577 = vmatprep.mubr.bf16.mxu0 0
          %2578 = vmatmul.mubr.bf16.gmra.mxu0 %v2502
          %v2579 = vpop.f32.mrf.mxu0
          %v2580 = vadd.f32 %v2463, %v2579
          %v2581 = vpop.f32.mrf.mxu0
          %v2582 = vpop.f32.mrf.mxu0
          %v2583 = vadd.f32 %v2463, %v2582
          %v2584 = vpop.f32.mrf.mxu0
          %2585 = vmatprep.mubr.bf16.mxu0 0
          %2586 = vmatmul.mubr.bf16.gmra.mxu0 %v2505
          %v2587 = vpop.f32.mrf.mxu0
          %v2588 = vadd.f32 %v2463, %v2587
          %v2589 = vpop.f32.mrf.mxu0
          %v2590 = vpop.f32.mrf.mxu0
          %v2591 = vadd.f32 %v2463, %v2590
          %v2592 = vpop.f32.mrf.mxu0
          %2593 = vmatprep.mubr.bf16.mxu0 0
          %2594 = vmatmul.mubr.bf16.gmra.mxu0 %v2508
          %v2595 = vpop.f32.mrf.mxu0
          %v2596 = vadd.f32 %v2463, %v2595
          %v2597 = vpop.f32.mrf.mxu0
          %v2598 = vpop.f32.mrf.mxu0
          %v2599 = vadd.f32 %v2463, %v2598
          %v2600 = vpop.f32.mrf.mxu0
          %2601 = vmatprep.mubr.bf16.mxu0 0
          %2602 = vmatmul.mubr.bf16.gmra.mxu0 %v2511
          %v2603 = vpop.f32.mrf.mxu0
          %v2604 = vadd.f32 %v2463, %v2603
          %v2605 = vpop.f32.mrf.mxu0
          %v2606 = vpop.f32.mrf.mxu0
          %v2607 = vadd.f32 %v2463, %v2606
          %v2608 = vpop.f32.mrf.mxu0
          %2609 = vdwg.mxu0
          %2610 = vmax.xlane.f32.xlu0 %v2548
          %v2611 = vpop.xlane.xlu0 %2610
          %2612 = vmax.xlane.f32.xlu0 %v2551
          %v2613 = vpop.xlane.xlu0 %2612
          %2614 = vmax.xlane.f32.xlu0 %v2556
          %v2615 = vpop.xlane.xlu0 %2614
          %2616 = vmax.xlane.f32.xlu0 %v2559
          %v2617 = vpop.xlane.xlu0 %2616
          %2618 = vmax.xlane.f32.xlu0 %v2564
          %v2619 = vpop.xlane.xlu0 %2618
          %2620 = vmax.xlane.f32.xlu0 %v2567
          %v2621 = vpop.xlane.xlu0 %2620
          %2622 = vmax.xlane.f32.xlu0 %v2572
          %v2623 = vpop.xlane.xlu0 %2622
          %2624 = vmax.xlane.f32.xlu0 %v2575
          %v2625 = vpop.xlane.xlu0 %2624
          %2626 = vmax.xlane.f32.xlu0 %v2580
          %v2627 = vpop.xlane.xlu0 %2626
          %2628 = vmax.xlane.f32.xlu0 %v2583
          %v2629 = vpop.xlane.xlu0 %2628
          %2630 = vmax.xlane.f32.xlu0 %v2588
          %v2631 = vpop.xlane.xlu0 %2630
          %2632 = vmax.xlane.f32.xlu0 %v2591
          %v2633 = vpop.xlane.xlu0 %2632
          %2634 = vmax.xlane.f32.xlu0 %v2596
          %v2635 = vpop.xlane.xlu0 %2634
          %2636 = vmax.xlane.f32.xlu0 %v2599
          %v2637 = vpop.xlane.xlu0 %2636
          %2638 = vmax.xlane.f32.xlu0 %v2604
          %v2639 = vpop.xlane.xlu0 %2638
          %2640 = vmax.xlane.f32.xlu0 %v2607
          %v2641 = vpop.xlane.xlu0 %2640
          %v2642 = vsub.f32 %v2548, %v2611
          %v2643 = vsub.f32 %v2551, %v2613
          %v2644 = vsub.f32 %v2556, %v2615
          %v2645 = vsub.f32 %v2559, %v2617
          %v2646 = vsub.f32 %v2564, %v2619
          %v2647 = vsub.f32 %v2567, %v2621
          %v2648 = vsub.f32 %v2572, %v2623
          %v2649 = vsub.f32 %v2575, %v2625
          %v2650 = vsub.f32 %v2580, %v2627
          %v2651 = vsub.f32 %v2583, %v2629
          %v2652 = vsub.f32 %v2588, %v2631
          %v2653 = vsub.f32 %v2591, %v2633
          %v2654 = vsub.f32 %v2596, %v2635
          %v2655 = vsub.f32 %v2599, %v2637
          %v2656 = vsub.f32 %v2604, %v2639
          %v2657 = vsub.f32 %v2607, %v2641
          %v2658 = vmul.f32 %v2642, 1.442695
          %v2659 = vpow.pop %v2658
          %v2660 = vmul.f32 %v2643, 1.442695
          %v2661 = vpow.pop %v2660
          %v2662 = vmul.f32 %v2644, 1.442695
          %v2663 = vpow.pop %v2662
          %v2664 = vmul.f32 %v2645, 1.442695
          %v2665 = vpow.pop %v2664
          %v2666 = vmul.f32 %v2646, 1.442695
          %v2667 = vpow.pop %v2666
          %v2668 = vmul.f32 %v2647, 1.442695
          %v2669 = vpow.pop %v2668
          %v2670 = vmul.f32 %v2648, 1.442695
          %v2671 = vpow.pop %v2670
          %v2672 = vmul.f32 %v2649, 1.442695
          %v2673 = vpow.pop %v2672
          %v2674 = vmul.f32 %v2650, 1.442695
          %v2675 = vpow.pop %v2674
          %v2676 = vmul.f32 %v2651, 1.442695
          %v2677 = vpow.pop %v2676
          %v2678 = vmul.f32 %v2652, 1.442695
          %v2679 = vpow.pop %v2678
          %v2680 = vmul.f32 %v2653, 1.442695
          %v2681 = vpow.pop %v2680
          %v2682 = vmul.f32 %v2654, 1.442695
          %v2683 = vpow.pop %v2682
          %v2684 = vmul.f32 %v2655, 1.442695
          %v2685 = vpow.pop %v2684
          %v2686 = vmul.f32 %v2656, 1.442695
          %v2687 = vpow.pop %v2686
          %v2688 = vmul.f32 %v2657, 1.442695
          %v2689 = vpow.pop %v2688
          %2690 = vadd.xlane.f32.xlu0 %v2659
          %v2691 = vpop.xlane.xlu0 %2690
          %2692 = vadd.xlane.f32.xlu0 %v2661
          %v2693 = vpop.xlane.xlu0 %2692
          %2694 = vadd.xlane.f32.xlu0 %v2663
          %v2695 = vpop.xlane.xlu0 %2694
          %2696 = vadd.xlane.f32.xlu0 %v2665
          %v2697 = vpop.xlane.xlu0 %2696
          %2698 = vadd.xlane.f32.xlu0 %v2667
          %v2699 = vpop.xlane.xlu0 %2698
          %2700 = vadd.xlane.f32.xlu0 %v2669
          %v2701 = vpop.xlane.xlu0 %2700
          %2702 = vadd.xlane.f32.xlu0 %v2671
          %v2703 = vpop.xlane.xlu0 %2702
          %2704 = vadd.xlane.f32.xlu0 %v2673
          %v2705 = vpop.xlane.xlu0 %2704
          %2706 = vadd.xlane.f32.xlu0 %v2675
          %v2707 = vpop.xlane.xlu0 %2706
          %2708 = vadd.xlane.f32.xlu0 %v2677
          %v2709 = vpop.xlane.xlu0 %2708
          %2710 = vadd.xlane.f32.xlu0 %v2679
          %v2711 = vpop.xlane.xlu0 %2710
          %2712 = vadd.xlane.f32.xlu0 %v2681
          %v2713 = vpop.xlane.xlu0 %2712
          %2714 = vadd.xlane.f32.xlu0 %v2683
          %v2715 = vpop.xlane.xlu0 %2714
          %2716 = vadd.xlane.f32.xlu0 %v2685
          %v2717 = vpop.xlane.xlu0 %2716
          %2718 = vadd.xlane.f32.xlu0 %v2687
          %v2719 = vpop.xlane.xlu0 %2718
          %2720 = vadd.xlane.f32.xlu0 %v2689
          %v2721 = vpop.xlane.xlu0 %2720
          %v2722 = vlog2.pop %v2691
          %v2723 = vmul.f32 %v2722, 0.6931472
          %v2724 = vlog2.pop %v2693
          %v2725 = vmul.f32 %v2724, 0.6931472
          %v2726 = vlog2.pop %v2695
          %v2727 = vmul.f32 %v2726, 0.6931472
          %v2728 = vlog2.pop %v2697
          %v2729 = vmul.f32 %v2728, 0.6931472
          %v2730 = vlog2.pop %v2699
          %v2731 = vmul.f32 %v2730, 0.6931472
          %v2732 = vlog2.pop %v2701
          %v2733 = vmul.f32 %v2732, 0.6931472
          %v2734 = vlog2.pop %v2703
          %v2735 = vmul.f32 %v2734, 0.6931472
          %v2736 = vlog2.pop %v2705
          %v2737 = vmul.f32 %v2736, 0.6931472
          %v2738 = vlog2.pop %v2707
          %v2739 = vmul.f32 %v2738, 0.6931472
          %v2740 = vlog2.pop %v2709
          %v2741 = vmul.f32 %v2740, 0.6931472
          %v2742 = vlog2.pop %v2711
          %v2743 = vmul.f32 %v2742, 0.6931472
          %v2744 = vlog2.pop %v2713
          %v2745 = vmul.f32 %v2744, 0.6931472
          %v2746 = vlog2.pop %v2715
          %v2747 = vmul.f32 %v2746, 0.6931472
          %v2748 = vlog2.pop %v2717
          %v2749 = vmul.f32 %v2748, 0.6931472
          %v2750 = vlog2.pop %v2719
          %v2751 = vmul.f32 %v2750, 0.6931472
          %v2752 = vlog2.pop %v2721
          %v2753 = vmul.f32 %v2752, 0.6931472
          %v2754 = vsub.f32 %v2642, %v2723
          %v2755 = vsub.f32 %v2643, %v2725
          %v2756 = vsub.f32 %v2644, %v2727
          %v2757 = vsub.f32 %v2645, %v2729
          %v2758 = vsub.f32 %v2646, %v2731
          %v2759 = vsub.f32 %v2647, %v2733
          %v2760 = vsub.f32 %v2648, %v2735
          %v2761 = vsub.f32 %v2649, %v2737
          %v2762 = vsub.f32 %v2650, %v2739
          %v2763 = vsub.f32 %v2651, %v2741
          %v2764 = vsub.f32 %v2652, %v2743
          %v2765 = vsub.f32 %v2653, %v2745
          %v2766 = vsub.f32 %v2654, %v2747
          %v2767 = vsub.f32 %v2655, %v2749
          %v2768 = vsub.f32 %v2656, %v2751
          %v2769 = vsub.f32 %v2657, %v2753
          %2770 = vst [vmem:[%s219] sm:$0xff] %v2754
          %2771 = vst [vmem:[%s219 + $0x8] sm:$0xff] %v2755
          %2772 = vst [vmem:[%s219 + $0x10] sm:$0xff] %v2756
          %2773 = vst [vmem:[%s219 + $0x18] sm:$0xff] %v2757
          %2774 = vst [vmem:[%s219 + $0x20] sm:$0xff] %v2758
          %2775 = vst [vmem:[%s219 + $0x28] sm:$0xff] %v2759
          %2776 = vst [vmem:[%s219 + $0x30] sm:$0xff] %v2760
          %2777 = vst [vmem:[%s219 + $0x38] sm:$0xff] %v2761
          %2778 = vst [vmem:[%s219 + $0x40] sm:$0xff] %v2762
          %2779 = vst [vmem:[%s219 + $0x48] sm:$0xff] %v2763
          %2780 = vst [vmem:[%s219 + $0x50] sm:$0xff] %v2764
          %2781 = vst [vmem:[%s219 + $0x58] sm:$0xff] %v2765
          %2782 = vst [vmem:[%s219 + $0x60] sm:$0xff] %v2766
          %2783 = vst [vmem:[%s219 + $0x68] sm:$0xff] %v2767
          %2784 = vst [vmem:[%s219 + $0x70] sm:$0xff] %v2768
          %2785 = vst [vmem:[%s219 + $0x78] sm:$0xff] %v2769
        $region44: #{tpu_custom_call.1} parent=35 // pred_fallthru
          _
        %s2786 = sand.u32 %s132, 1
        %s2787 = scalar_lea.sflag [#allocation4], %s2786
        %s2788 = sand.u32 %s132, 1
        %s2789 = smul.addr %s2788, 128
        %s2790 = scalar_lea.vmem [#allocation3], %s2789
        // Predicated region
        $region45: #{tpu_custom_call.1} parent=35 // pred_check
          %p2791 = pneg %p142
        $region46: #{tpu_custom_call.1} parent=35 // pred_check_branch
          %2793 = sbr.rel (%p2791) target = $region48
        $region47: #{tpu_custom_call.1} parent=35 // pred_region
          %s2794 = smul.u32 16, %s22
          %s2796 = ssub.s32 2048, 2048
          %2797 = vsyncadd %s2787, %s2796
          %s2798 = smul.addr %s2794, 128
          %s2799 = scalar_lea.hbm %s4, %s2798
          %s2800 = sshll.u32 %s2790, 4
          %s2801 = int_to_ptr.vmem [resolvable:$true] %s2800
          %2806 = dma.vmem_to_hbm [thread:$0]  %s2801, 2048, %s2799, %s2787, 128, 128, 8
        $region48: #{tpu_custom_call.1} parent=35 // pred_fallthru
          _
      $region36: #{tpu_custom_call.1} parent=5 // pred_fallthru
        _
      %p2807 = scmp.le.s32.totalorder 2, %s13
      // Predicated region
      $region49: #{tpu_custom_call.1} parent=5 // pred_check
        %p2808 = pneg %p2807
      $region50: #{tpu_custom_call.1} parent=5 // pred_check_branch
        %2810 = sbr.rel (%p2808) target = $region52
      $region51: #{tpu_custom_call.1} parent=5 // pred_region
        %s2811 = ssub.s32 %s13, 2
        // Predicated region
        $region53: #{tpu_custom_call.1} parent=51 // pred_check
          %p2812 = pneg %p148
        $region54: #{tpu_custom_call.1} parent=51 // pred_check_branch
          %2814 = sbr.rel (%p2812) target = $region56
        $region55: #{tpu_custom_call.1} parent=51 // pred_region
          %s2815 = sand.u32 %s133, 1
          %s2816 = scalar_lea.sflag [#allocation4], %s2815
          %s2817 = sand.u32 %s133, 1
          %s2818 = smul.addr %s2817, 128
          %s2819 = scalar_lea.vmem [#allocation3], %s2818
          %2820 = dma.done %s2816, 2048
        $region56: #{tpu_custom_call.1} parent=51 // pred_fallthru
          _
      $region52: #{tpu_custom_call.1} parent=5 // pred_fallthru
        _
    $region6: #{tpu_custom_call.1} parent=1 // loop_footer
      %s17 = sadd.s32 1, %s13
    $region7: #{tpu_custom_call.1} parent=1 // loop_footer_branch
      %12 = sbr.rel target = $region3
    $region8: #{tpu_custom_call.1} parent=1 // loop_exit
      _
    %2821 = vsyncpa [#allocation4], 1
    %s2822 = scalar_lea.sflag [#allocation4], 1
    %2823 = vsyncpa %s2822, 1

</llo_original>
